<compile_context>
chip_gen: v7x
topology: tpu7x:2x2x1
jax: 0.10.0
libtpu: 0.0.40
codegen_flags: <defaults>
</compile_context>

<pallas_src>
import functools

import jax
import jax.numpy as jnp
from jax.experimental import pallas as pl
from jax.experimental.pallas import tpu as pltpu

EPS = 1e-5


def _basic_block_kernel(x_ref, band1_ref, band2_ref, grp_ref, grpTg_ref,
                        beta_ref, out_ref, st_ref, *, depth):
    # x_ref     : (N*D, H*W*C)       lane-dense f32 activations (also the residual)
    # band*_ref : (3*H*W*C, H*W*C)   stacked banded conv weights, rows = [kd=0 | kd=1 | kd=2]
    #                                (kh/kw taps + H/W zero padding folded in); f32 or bf16
    # grp_ref   : (H*W*C, C)         lane -> channel grouping matrix, scaled by 1/count
    # grpTg_ref : (2, C, H*W*C)      channel -> lane broadcast matrices, scaled by gamma (BN1/BN2)
    # beta_ref  : (2, H*W*C)         per-lane beta rows for BN1/BN2
    # out_ref   : (N*D, H*W*C)       f32 output
    # st_ref    : (2, H*W*C)         f32 scratch for the merged BN statistics LHS
    m2 = x_ref.shape[0]
    x = x_ref[...]                                              # f32

    rows = jax.lax.broadcasted_iota(jnp.int32, (m2, 1), 0)
    mask_up = (rows % depth) != 0                # row r reads r-1: invalid at depth index 0
    mask_dn = (rows % depth) != (depth - 1)      # row r reads r+1: invalid at depth index D-1
    two = jax.lax.broadcasted_iota(jnp.int32, (2, 1), 0)

    def conv(v, band_ref):
        # Depth taps via sublane rolls (XLU) + boundary masks, then ONE fat matmul (K = 3*HWC).
        v_up = jnp.where(mask_up, pltpu.roll(v, 1, axis=0), 0.0)       # v_up[r] = v[r-1] or 0
        v_dn = jnp.where(mask_dn, pltpu.roll(v, m2 - 1, axis=0), 0.0)  # v_dn[r] = v[r+1] or 0
        v3 = jnp.concatenate([v_up, v, v_dn], axis=1).astype(band_ref.dtype)
        return jnp.dot(v3, band_ref[...], preferred_element_type=jnp.float32)

    def bn(acts, idx):
        # Merged one-pass batch statistics: a single (2,HWC)@(HWC,C) grouping matmul for
        # [sum; sum_sq] (1/count folded into grp), then a single (2,C)@(C,HWC) broadcast matmul
        # for [gamma*mean*inv_std; gamma*inv_std] (gamma folded into grpTg). Normalize is one FMA.
        st_ref[0:1, :] = jnp.sum(acts, axis=0, keepdims=True)
        st_ref[1:2, :] = jnp.sum(acts * acts, axis=0, keepdims=True)
        stats = jnp.dot(st_ref[...], grp_ref[...],
                        preferred_element_type=jnp.float32)            # (2, C): [mean; E[x^2]]
        mean_c = stats[0:1, :]
        var_c = stats[1:2, :] - mean_c * mean_c
        inv_c = jax.lax.rsqrt(var_c + EPS)                             # (1, C)
        pair = jnp.where(two == 0, stats, 1.0) * inv_c                 # (2, C): [mean*inv; inv]
        bcast = jnp.dot(pair, grpTg_ref[idx],
                        preferred_element_type=jnp.float32)            # (2, HWC)
        scale_l = bcast[1:2, :]                                        # gamma * inv_std per lane
        bias_l = beta_ref[idx:idx + 1, :] - bcast[0:1, :]              # beta - gamma*mean*inv_std
        return acts * scale_l + bias_l

    a1 = conv(x, band1_ref)
    h = jnp.maximum(bn(a1, 0), 0.0)
    a2 = conv(h, band2_ref)
    o = bn(a2, 1) + x                                                  # residual from same input
    out_ref[...] = jnp.maximum(o, 0.0)


def _make_band_weights(w_oidhw, H, W):
    """OIDHW conv weight -> (3*H*W*Ci, H*W*Co) stacked banded matrices (kh/kw + H/W padding)."""
    Co, Ci = w_oidhw.shape[0], w_oidhw.shape[1]
    wk = jnp.transpose(w_oidhw, (2, 3, 4, 1, 0)).astype(jnp.float32)   # (kd, kh, kw, Ci, Co)
    # Shift matrices S[in, out] = 1 iff in == out + (k-1); jnp.eye puts ones at [i, i+k].
    eyeH = [jnp.eye(H, H, k=-(kh - 1), dtype=jnp.float32) for kh in range(3)]
    eyeW = [jnp.eye(W, W, k=-(kw - 1), dtype=jnp.float32) for kw in range(3)]
    bands = []
    for kd in range(3):
        b = jnp.zeros((H, W, Ci, H, W, Co), jnp.float32)
        for kh in range(3):
            for kw in range(3):
                b = b + jnp.einsum('ab,cd,io->acibdo', eyeH[kh], eyeW[kw], wk[kd, kh, kw])
        bands.append(b.reshape(H * W * Ci, H * W * Co))
    return jnp.concatenate(bands, axis=0)                              # (3*H*W*Ci, H*W*Co)


def prepare_basic_block_params(w1, g1, b1, w2, g2, b2, *, N, D, H, W,
                               compute_dtype=jnp.float32):
    """Per-layer constants; precompute once and reuse across calls (hoisted off per-call path).

    compute_dtype: dtype of the conv matmul operands (bands + LHS). Use jnp.bfloat16 on
    v6e/v7x for MXU rate and half the band bytes; BN stats/residual/output stay f32.
    """
    C = w1.shape[0]
    assert w1.shape[1] == C and w2.shape[0] == C and w2.shape[1] == C, \
        "stride=1, downsample=None -> in_planes must equal planes"
    HWC = H * W * C

    band1 = _make_band_weights(w1, H, W).astype(compute_dtype)         # (3*HWC, HWC)
    band2 = _make_band_weights(w2, H, W).astype(compute_dtype)

    inv_count = 1.0 / float(N * D * H * W)
    lane_c = jnp.arange(HWC) % C                                       # channel is fastest lane
    onehot = (lane_c[:, None] == jnp.arange(C)[None, :]).astype(jnp.float32)   # (HWC, C)
    grp_s = onehot * inv_count                                         # stats grouping (HWC, C)
    grpT = jnp.transpose(onehot)                                       # (C, HWC)
    grpTg = jnp.stack([grpT * g1.astype(jnp.float32)[:, None],
                       grpT * g2.astype(jnp.float32)[:, None]])        # (2, C, HWC)
    betas = jnp.stack([jnp.tile(b1.astype(jnp.float32), H * W),
                       jnp.tile(b2.astype(jnp.float32), H * W)])       # (2, HWC)
    return band1, band2, grp_s, grpTg, betas


def basic_block_apply(params, x_ncdhw):
    """x_ncdhw: (N, C, D, H, W) f32. Returns (N, C, D, H, W) f32."""
    band1, band2, grp_s, grpTg, betas = params
    N, C, D, H, W = x_ncdhw.shape
    HWC = H * W * C
    M2 = N * D

    # NCDHW -> lane-dense (N*D, H*W*C); this is also the residual (no duplicate copy).
    x2 = jnp.transpose(x_ncdhw, (0, 2, 3, 4, 1)).astype(jnp.float32).reshape(M2, HWC)

    kernel = functools.partial(_basic_block_kernel, depth=D)
    vmem = pl.BlockSpec(memory_space=pltpu.MemorySpace.VMEM)
    out2d = pl.pallas_call(
        kernel,
        out_shape=jax.ShapeDtypeStruct((M2, HWC), jnp.float32),
        in_specs=[vmem] * 6,
        out_specs=vmem,
        scratch_shapes=[pltpu.VMEM((2, HWC), jnp.float32)],
        compiler_params=pltpu.CompilerParams(vmem_limit_bytes=32 * 1024 * 1024),
    )(x2, band1, band2, grp_s, grpTg, betas)

    out = out2d.reshape(N, D, H, W, C)
    return jnp.transpose(out, (0, 4, 1, 2, 3))                         # back to NCDHW


def basic_block_reference(x, w1, g1, b1, w2, g2, b2):
    """Pure-JAX reference in NCDHW (mirrors PyTorch BasicBlock.forward, BN training mode)."""
    dn = jax.lax.conv_dimension_numbers(x.shape, w1.shape, ('NCDHW', 'OIDHW', 'NCDHW'))

    def conv(inp, w):
        return jax.lax.conv_general_dilated(inp, w, (1, 1, 1),
                                            ((1, 1), (1, 1), (1, 1)),
                                            dimension_numbers=dn)

    def bn(inp, g, b):
        mean = jnp.mean(inp, axis=(0, 2, 3, 4), keepdims=True)
        var = jnp.mean((inp - mean) ** 2, axis=(0, 2, 3, 4), keepdims=True)
        return ((inp - mean) * jax.lax.rsqrt(var + EPS)
                * g.reshape(1, -1, 1, 1, 1) + b.reshape(1, -1, 1, 1, 1))

    out = jnp.maximum(bn(conv(x, w1), g1, b1), 0.0)
    out = bn(conv(out, w2), g2, b2)
    return jnp.maximum(out + x, 0.0)


if __name__ == "__main__":
    key = jax.random.PRNGKey(0)
    k_x, k_w1, k_w2, k_g1, k_b1, k_g2, k_b2 = jax.random.split(key, 7)

    N, C, D, H, W = 2, 4, 8, 8, 8           # in_planes = planes = 4, stride = 1
    x = jax.random.normal(k_x, (N, C, D, H, W), jnp.float32)
    w1 = jax.random.normal(k_w1, (C, C, 3, 3, 3), jnp.float32) * 0.1   # OIDHW, bias=False
    w2 = jax.random.normal(k_w2, (C, C, 3, 3, 3), jnp.float32) * 0.1
    g1 = 1.0 + 0.1 * jax.random.normal(k_g1, (C,), jnp.float32)        # BatchNorm3d affine
    b1 = 0.1 * jax.random.normal(k_b1, (C,), jnp.float32)
    g2 = 1.0 + 0.1 * jax.random.normal(k_g2, (C,), jnp.float32)
    b2 = 0.1 * jax.random.normal(k_b2, (C,), jnp.float32)

    ref = jax.block_until_ready(basic_block_reference(x, w1, g1, b1, w2, g2, b2))

    fwd = jax.jit(basic_block_apply)

    # f32 path (bit-accuracy check against the pure-JAX reference).
    params_f32 = prepare_basic_block_params(w1, g1, b1, w2, g2, b2, N=N, D=D, H=H, W=W,
                                            compute_dtype=jnp.float32)
    out = jax.block_until_ready(fwd(params_f32, x))
    assert out.shape == (N, C, D, H, W)
    assert jnp.allclose(out, ref, atol=1e-4, rtol=1e-4), \
        f"f32 max abs err = {jnp.max(jnp.abs(out - ref))}"

    # bf16 MXU-operand path (recommended on v6e/v7x); looser tolerance is inherent to bf16 weights.
    params_bf16 = prepare_basic_block_params(w1, g1, b1, w2, g2, b2, N=N, D=D, H=H, W=W,
                                             compute_dtype=jnp.bfloat16)
    out_bf16 = jax.block_until_ready(fwd(params_bf16, x))
    assert jnp.allclose(out_bf16, ref, atol=5e-2, rtol=5e-2), \
        f"bf16 max abs err = {jnp.max(jnp.abs(out_bf16 - ref))}"

    print("KERNEL_OK")
</pallas_src>

<mosaic_0001>
module attributes {stable_mosaic.version = 11 : i64} {
  func.func @_basic_block_kernel(%arg0: memref<16x256xf32, #tpu.memory_space<vmem>>, %arg1: memref<768x256xf32, #tpu.memory_space<vmem>>, %arg2: memref<768x256xf32, #tpu.memory_space<vmem>>, %arg3: memref<256x4xf32, #tpu.memory_space<vmem>>, %arg4: memref<2x4x256xf32, #tpu.memory_space<vmem>>, %arg5: memref<2x256xf32, #tpu.memory_space<vmem>>, %arg6: memref<16x256xf32, #tpu.memory_space<vmem>>, %arg7: memref<2x256xf32, #tpu.memory_space<vmem>>) attributes {dimension_semantics = [], scalar_prefetch = 0 : i64, scratch_operands = 1 : i64, tpu.core_type = #tpu.core_type<tc>} {
    %c0 = arith.constant 0 : index
    %c0_0 = arith.constant 0 : index
    %0 = vector.load %arg0[%c0, %c0_0] : memref<16x256xf32, #tpu.memory_space<vmem>>, vector<16x256xf32>
    %1 = tpu.iota {dimensions = array<i32: 0>} : vector<16x1xi32>
    %c8_i32 = arith.constant 8 : i32
    %c0_i32 = arith.constant 0 : i32
    %2 = arith.cmpi eq, %c8_i32, %c0_i32 : i32
    %c1_i32 = arith.constant 1 : i32
    %3 = arith.select %2, %c1_i32, %c8_i32 : i32
    %4 = vector.broadcast %3 : i32 to vector<16x1xi32>
    %5 = arith.remsi %1, %4 : vector<16x1xi32>
    %c0_i32_1 = arith.constant 0 : i32
    %6 = vector.broadcast %c0_i32_1 : i32 to vector<16x1xi32>
    %7 = arith.cmpi ne, %5, %6 : vector<16x1xi32>
    %c0_i32_2 = arith.constant 0 : i32
    %8 = vector.broadcast %c0_i32_2 : i32 to vector<16x1xi32>
    %9 = arith.cmpi slt, %5, %8 : vector<16x1xi32>
    %c0_i32_3 = arith.constant 0 : i32
    %10 = arith.cmpi slt, %3, %c0_i32_3 : i32
    %11 = vector.broadcast %10 : i1 to vector<16x1xi1>
    %12 = vector.broadcast %11 : vector<16x1xi1> to vector<16x1xi1>
    %13 = arith.xori %9, %12 : vector<16x1xi1>
    %14 = arith.andi %13, %7 : vector<16x1xi1>
    %15 = vector.broadcast %3 : i32 to vector<16x1xi32>
    %16 = arith.addi %5, %15 : vector<16x1xi32>
    %17 = arith.select %14, %16, %5 : vector<16x1xi1>, vector<16x1xi32>
    %c0_i32_4 = arith.constant 0 : i32
    %18 = vector.broadcast %c0_i32_4 : i32 to vector<16x1xi32>
    %19 = arith.cmpi ne, %17, %18 : vector<16x1xi32>
    %c8_i32_5 = arith.constant 8 : i32
    %c0_i32_6 = arith.constant 0 : i32
    %20 = arith.cmpi eq, %c8_i32_5, %c0_i32_6 : i32
    %c1_i32_7 = arith.constant 1 : i32
    %21 = arith.select %20, %c1_i32_7, %c8_i32_5 : i32
    %22 = vector.broadcast %21 : i32 to vector<16x1xi32>
    %23 = arith.remsi %1, %22 : vector<16x1xi32>
    %c0_i32_8 = arith.constant 0 : i32
    %24 = vector.broadcast %c0_i32_8 : i32 to vector<16x1xi32>
    %25 = arith.cmpi ne, %23, %24 : vector<16x1xi32>
    %c0_i32_9 = arith.constant 0 : i32
    %26 = vector.broadcast %c0_i32_9 : i32 to vector<16x1xi32>
    %27 = arith.cmpi slt, %23, %26 : vector<16x1xi32>
    %c0_i32_10 = arith.constant 0 : i32
    %28 = arith.cmpi slt, %21, %c0_i32_10 : i32
    %29 = vector.broadcast %28 : i1 to vector<16x1xi1>
    %30 = vector.broadcast %29 : vector<16x1xi1> to vector<16x1xi1>
    %31 = arith.xori %27, %30 : vector<16x1xi1>
    %32 = arith.andi %31, %25 : vector<16x1xi1>
    %33 = vector.broadcast %21 : i32 to vector<16x1xi32>
    %34 = arith.addi %23, %33 : vector<16x1xi32>
    %35 = arith.select %32, %34, %23 : vector<16x1xi1>, vector<16x1xi32>
    %c7_i32 = arith.constant 7 : i32
    %36 = vector.broadcast %c7_i32 : i32 to vector<16x1xi32>
    %37 = arith.cmpi ne, %35, %36 : vector<16x1xi32>
    %38 = tpu.iota {dimensions = array<i32: 0>} : vector<2x1xi32>
    %c1_i32_11 = arith.constant 1 : i32
    %39 = tpu.dynamic_rotate %0 by %c1_i32_11 dim 0 : vector<16x256xf32>, i32 -> vector<16x256xf32>
    %cst = arith.constant 0.000000e+00 : f32
    %40 = vector.shape_cast %19 : vector<16x1xi1> to vector<16x1xi1>
    %41 = vector.broadcast %40 : vector<16x1xi1> to vector<16x256xi1>
    %42 = vector.broadcast %cst : f32 to vector<16x256xf32>
    %43 = arith.select %41, %39, %42 : vector<16x256xi1>, vector<16x256xf32>
    %c15_i32 = arith.constant 15 : i32
    %44 = tpu.dynamic_rotate %0 by %c15_i32 dim 0 : vector<16x256xf32>, i32 -> vector<16x256xf32>
    %cst_12 = arith.constant 0.000000e+00 : f32
    %45 = vector.shape_cast %37 : vector<16x1xi1> to vector<16x1xi1>
    %46 = vector.broadcast %45 : vector<16x1xi1> to vector<16x256xi1>
    %47 = vector.broadcast %cst_12 : f32 to vector<16x256xf32>
    %48 = arith.select %46, %44, %47 : vector<16x256xi1>, vector<16x256xf32>
    %49 = tpu.concatenate %43, %0, %48 in 1 : vector<16x256xf32>, vector<16x256xf32>, vector<16x256xf32> -> vector<16x768xf32>
    %c0_13 = arith.constant 0 : index
    %c0_14 = arith.constant 0 : index
    %50 = vector.load %arg1[%c0_13, %c0_14] : memref<768x256xf32, #tpu.memory_space<vmem>>, vector<768x256xf32>
    %cst_15 = arith.constant dense<0.000000e+00> : vector<16x256xf32>
    %51 = tpu.matmul %49, %50, %cst_15 {dimension_numbers = #tpu.dot_dimension_numbers<[1], [0], [0], [1], [0, 0, 1, 1], [], []>} : vector<16x768xf32>, vector<768x256xf32>, vector<16x256xf32> -> vector<16x256xf32>
    %cst_16 = arith.constant dense<0.000000e+00> : vector<256xf32>
    %52 = vector.multi_reduction <add>, %51, %cst_16 [0] : vector<16x256xf32> to vector<256xf32>
    %53 = vector.shape_cast %52 : vector<256xf32> to vector<1x256xf32>
    %c0_17 = arith.constant 0 : index
    %c0_18 = arith.constant 0 : index
    %54 = vector.load %arg7[%c0_17, %c0_18] : memref<2x256xf32, #tpu.memory_space<vmem>>, vector<1x256xf32>
    tpu.vector_store %arg7[%c0_17, %c0_18], %53 {strides = array<i32>} : memref<2x256xf32, #tpu.memory_space<vmem>>, vector<1x256xf32>,
    %55 = arith.mulf %51, %51 : vector<16x256xf32>
    %cst_19 = arith.constant dense<0.000000e+00> : vector<256xf32>
    %56 = vector.multi_reduction <add>, %55, %cst_19 [0] : vector<16x256xf32> to vector<256xf32>
    %57 = vector.shape_cast %56 : vector<256xf32> to vector<1x256xf32>
    %c1 = arith.constant 1 : index
    %c0_20 = arith.constant 0 : index
    %58 = vector.load %arg7[%c1, %c0_20] : memref<2x256xf32, #tpu.memory_space<vmem>>, vector<1x256xf32>
    tpu.vector_store %arg7[%c1, %c0_20], %57 {strides = array<i32>} : memref<2x256xf32, #tpu.memory_space<vmem>>, vector<1x256xf32>,
    %c0_21 = arith.constant 0 : index
    %c0_22 = arith.constant 0 : index
    %59 = vector.load %arg7[%c0_21, %c0_22] : memref<2x256xf32, #tpu.memory_space<vmem>>, vector<2x256xf32>
    %c0_23 = arith.constant 0 : index
    %c0_24 = arith.constant 0 : index
    %60 = vector.load %arg3[%c0_23, %c0_24] : memref<256x4xf32, #tpu.memory_space<vmem>>, vector<256x4xf32>
    %cst_25 = arith.constant dense<0.000000e+00> : vector<2x4xf32>
    %61 = tpu.matmul %59, %60, %cst_25 {dimension_numbers = #tpu.dot_dimension_numbers<[1], [0], [0], [1], [0, 0, 1, 1], [], []>} : vector<2x256xf32>, vector<256x4xf32>, vector<2x4xf32> -> vector<2x4xf32>
    %62 = vector.extract_strided_slice %61 {offsets = [0, 0], sizes = [1, 4], strides = [1, 1]} : vector<2x4xf32> to vector<1x4xf32>
    %63 = vector.extract_strided_slice %61 {offsets = [1, 0], sizes = [1, 4], strides = [1, 1]} : vector<2x4xf32> to vector<1x4xf32>
    %64 = arith.mulf %62, %62 : vector<1x4xf32>
    %65 = arith.subf %63, %64 : vector<1x4xf32>
    %cst_26 = arith.constant 9.99999974E-6 : f32
    %66 = vector.broadcast %cst_26 : f32 to vector<1x4xf32>
    %67 = arith.addf %65, %66 : vector<1x4xf32>
    %68 = math.rsqrt %67 : vector<1x4xf32>
    %c0_i32_27 = arith.constant 0 : i32
    %69 = vector.broadcast %c0_i32_27 : i32 to vector<2x1xi32>
    %70 = arith.cmpi eq, %38, %69 : vector<2x1xi32>
    %cst_28 = arith.constant 1.000000e+00 : f32
    %71 = vector.shape_cast %70 : vector<2x1xi1> to vector<2x1xi1>
    %72 = vector.broadcast %71 : vector<2x1xi1> to vector<2x4xi1>
    %73 = vector.broadcast %cst_28 : f32 to vector<2x4xf32>
    %74 = arith.select %72, %61, %73 : vector<2x4xi1>, vector<2x4xf32>
    %75 = vector.broadcast %68 : vector<1x4xf32> to vector<2x4xf32>
    %76 = arith.mulf %74, %75 : vector<2x4xf32>
    %c0_29 = arith.constant 0 : index
    %c0_30 = arith.constant 0 : index
    %c0_31 = arith.constant 0 : index
    %77 = vector.load %arg4[%c0_29, %c0_30, %c0_31] : memref<2x4x256xf32, #tpu.memory_space<vmem>>, vector<1x4x256xf32>
    %78 = vector.shape_cast %77 : vector<1x4x256xf32> to vector<4x256xf32>
    %cst_32 = arith.constant dense<0.000000e+00> : vector<2x256xf32>
    %79 = tpu.matmul %76, %78, %cst_32 {dimension_numbers = #tpu.dot_dimension_numbers<[1], [0], [0], [1], [0, 0, 1, 1], [], []>} : vector<2x4xf32>, vector<4x256xf32>, vector<2x256xf32> -> vector<2x256xf32>
    %80 = vector.extract_strided_slice %79 {offsets = [1, 0], sizes = [1, 256], strides = [1, 1]} : vector<2x256xf32> to vector<1x256xf32>
    %c0_33 = arith.constant 0 : index
    %c0_34 = arith.constant 0 : index
    %81 = vector.load %arg5[%c0_33, %c0_34] : memref<2x256xf32, #tpu.memory_space<vmem>>, vector<1x256xf32>
    %82 = vector.extract_strided_slice %79 {offsets = [0, 0], sizes = [1, 256], strides = [1, 1]} : vector<2x256xf32> to vector<1x256xf32>
    %83 = arith.subf %81, %82 : vector<1x256xf32>
    %84 = vector.broadcast %80 : vector<1x256xf32> to vector<16x256xf32>
    %85 = arith.mulf %51, %84 : vector<16x256xf32>
    %86 = vector.broadcast %83 : vector<1x256xf32> to vector<16x256xf32>
    %87 = arith.addf %85, %86 : vector<16x256xf32>
    %cst_35 = arith.constant 0.000000e+00 : f32
    %88 = vector.broadcast %cst_35 : f32 to vector<16x256xf32>
    %89 = arith.maximumf %87, %88 : vector<16x256xf32>
    %c1_i32_36 = arith.constant 1 : i32
    %90 = tpu.dynamic_rotate %89 by %c1_i32_36 dim 0 : vector<16x256xf32>, i32 -> vector<16x256xf32>
    %cst_37 = arith.constant 0.000000e+00 : f32
    %91 = vector.shape_cast %19 : vector<16x1xi1> to vector<16x1xi1>
    %92 = vector.broadcast %91 : vector<16x1xi1> to vector<16x256xi1>
    %93 = vector.broadcast %cst_37 : f32 to vector<16x256xf32>
    %94 = arith.select %92, %90, %93 : vector<16x256xi1>, vector<16x256xf32>
    %c15_i32_38 = arith.constant 15 : i32
    %95 = tpu.dynamic_rotate %89 by %c15_i32_38 dim 0 : vector<16x256xf32>, i32 -> vector<16x256xf32>
    %cst_39 = arith.constant 0.000000e+00 : f32
    %96 = vector.shape_cast %37 : vector<16x1xi1> to vector<16x1xi1>
    %97 = vector.broadcast %96 : vector<16x1xi1> to vector<16x256xi1>
    %98 = vector.broadcast %cst_39 : f32 to vector<16x256xf32>
    %99 = arith.select %97, %95, %98 : vector<16x256xi1>, vector<16x256xf32>
    %100 = tpu.concatenate %94, %89, %99 in 1 : vector<16x256xf32>, vector<16x256xf32>, vector<16x256xf32> -> vector<16x768xf32>
    %c0_40 = arith.constant 0 : index
    %c0_41 = arith.constant 0 : index
    %101 = vector.load %arg2[%c0_40, %c0_41] : memref<768x256xf32, #tpu.memory_space<vmem>>, vector<768x256xf32>
    %cst_42 = arith.constant dense<0.000000e+00> : vector<16x256xf32>
    %102 = tpu.matmul %100, %101, %cst_42 {dimension_numbers = #tpu.dot_dimension_numbers<[1], [0], [0], [1], [0, 0, 1, 1], [], []>} : vector<16x768xf32>, vector<768x256xf32>, vector<16x256xf32> -> vector<16x256xf32>
    %cst_43 = arith.constant dense<0.000000e+00> : vector<256xf32>
    %103 = vector.multi_reduction <add>, %102, %cst_43 [0] : vector<16x256xf32> to vector<256xf32>
    %104 = vector.shape_cast %103 : vector<256xf32> to vector<1x256xf32>
    %c0_44 = arith.constant 0 : index
    %c0_45 = arith.constant 0 : index
    %105 = vector.load %arg7[%c0_44, %c0_45] : memref<2x256xf32, #tpu.memory_space<vmem>>, vector<1x256xf32>
    tpu.vector_store %arg7[%c0_44, %c0_45], %104 {strides = array<i32>} : memref<2x256xf32, #tpu.memory_space<vmem>>, vector<1x256xf32>,
    %106 = arith.mulf %102, %102 : vector<16x256xf32>
    %cst_46 = arith.constant dense<0.000000e+00> : vector<256xf32>
    %107 = vector.multi_reduction <add>, %106, %cst_46 [0] : vector<16x256xf32> to vector<256xf32>
    %108 = vector.shape_cast %107 : vector<256xf32> to vector<1x256xf32>
    %c1_47 = arith.constant 1 : index
    %c0_48 = arith.constant 0 : index
    %109 = vector.load %arg7[%c1_47, %c0_48] : memref<2x256xf32, #tpu.memory_space<vmem>>, vector<1x256xf32>
    tpu.vector_store %arg7[%c1_47, %c0_48], %108 {strides = array<i32>} : memref<2x256xf32, #tpu.memory_space<vmem>>, vector<1x256xf32>,
    %c0_49 = arith.constant 0 : index
    %c0_50 = arith.constant 0 : index
    %110 = vector.load %arg7[%c0_49, %c0_50] : memref<2x256xf32, #tpu.memory_space<vmem>>, vector<2x256xf32>
    %c0_51 = arith.constant 0 : index
    %c0_52 = arith.constant 0 : index
    %111 = vector.load %arg3[%c0_51, %c0_52] : memref<256x4xf32, #tpu.memory_space<vmem>>, vector<256x4xf32>
    %cst_53 = arith.constant dense<0.000000e+00> : vector<2x4xf32>
    %112 = tpu.matmul %110, %111, %cst_53 {dimension_numbers = #tpu.dot_dimension_numbers<[1], [0], [0], [1], [0, 0, 1, 1], [], []>} : vector<2x256xf32>, vector<256x4xf32>, vector<2x4xf32> -> vector<2x4xf32>
    %113 = vector.extract_strided_slice %112 {offsets = [0, 0], sizes = [1, 4], strides = [1, 1]} : vector<2x4xf32> to vector<1x4xf32>
    %114 = vector.extract_strided_slice %112 {offsets = [1, 0], sizes = [1, 4], strides = [1, 1]} : vector<2x4xf32> to vector<1x4xf32>
    %115 = arith.mulf %113, %113 : vector<1x4xf32>
    %116 = arith.subf %114, %115 : vector<1x4xf32>
    %cst_54 = arith.constant 9.99999974E-6 : f32
    %117 = vector.broadcast %cst_54 : f32 to vector<1x4xf32>
    %118 = arith.addf %116, %117 : vector<1x4xf32>
    %119 = math.rsqrt %118 : vector<1x4xf32>
    %c0_i32_55 = arith.constant 0 : i32
    %120 = vector.broadcast %c0_i32_55 : i32 to vector<2x1xi32>
    %121 = arith.cmpi eq, %38, %120 : vector<2x1xi32>
    %cst_56 = arith.constant 1.000000e+00 : f32
    %122 = vector.shape_cast %121 : vector<2x1xi1> to vector<2x1xi1>
    %123 = vector.broadcast %122 : vector<2x1xi1> to vector<2x4xi1>
    %124 = vector.broadcast %cst_56 : f32 to vector<2x4xf32>
    %125 = arith.select %123, %112, %124 : vector<2x4xi1>, vector<2x4xf32>
    %126 = vector.broadcast %119 : vector<1x4xf32> to vector<2x4xf32>
    %127 = arith.mulf %125, %126 : vector<2x4xf32>
    %c1_57 = arith.constant 1 : index
    %c0_58 = arith.constant 0 : index
    %c0_59 = arith.constant 0 : index
    %128 = vector.load %arg4[%c1_57, %c0_58, %c0_59] : memref<2x4x256xf32, #tpu.memory_space<vmem>>, vector<1x4x256xf32>
    %129 = vector.shape_cast %128 : vector<1x4x256xf32> to vector<4x256xf32>
    %cst_60 = arith.constant dense<0.000000e+00> : vector<2x256xf32>
    %130 = tpu.matmul %127, %129, %cst_60 {dimension_numbers = #tpu.dot_dimension_numbers<[1], [0], [0], [1], [0, 0, 1, 1], [], []>} : vector<2x4xf32>, vector<4x256xf32>, vector<2x256xf32> -> vector<2x256xf32>
    %131 = vector.extract_strided_slice %130 {offsets = [1, 0], sizes = [1, 256], strides = [1, 1]} : vector<2x256xf32> to vector<1x256xf32>
    %c1_61 = arith.constant 1 : index
    %c0_62 = arith.constant 0 : index
    %132 = vector.load %arg5[%c1_61, %c0_62] : memref<2x256xf32, #tpu.memory_space<vmem>>, vector<1x256xf32>
    %133 = vector.extract_strided_slice %130 {offsets = [0, 0], sizes = [1, 256], strides = [1, 1]} : vector<2x256xf32> to vector<1x256xf32>
    %134 = arith.subf %132, %133 : vector<1x256xf32>
    %135 = vector.broadcast %131 : vector<1x256xf32> to vector<16x256xf32>
    %136 = arith.mulf %102, %135 : vector<16x256xf32>
    %137 = vector.broadcast %134 : vector<1x256xf32> to vector<16x256xf32>
    %138 = arith.addf %136, %137 : vector<16x256xf32>
    %139 = arith.addf %138, %0 : vector<16x256xf32>
    %cst_63 = arith.constant 0.000000e+00 : f32
    %140 = vector.broadcast %cst_63 : f32 to vector<16x256xf32>
    %141 = arith.maximumf %139, %140 : vector<16x256xf32>
    %c0_64 = arith.constant 0 : index
    %c0_65 = arith.constant 0 : index
    %142 = vector.load %arg6[%c0_64, %c0_65] : memref<16x256xf32, #tpu.memory_space<vmem>>, vector<16x256xf32>
    tpu.vector_store %arg6[%c0_64, %c0_65], %141 {strides = array<i32>} : memref<16x256xf32, #tpu.memory_space<vmem>>, vector<16x256xf32>,
    return
  }
}

</mosaic_0001>

<llo_original>
// kernel: basic_block_apply.1
$region0: #{basic_block_apply.1}
  #allocation0 [shape = 'u32[]', space=smem, size = 0x4, offset = 0x4, fixed_abs, tag = 'smem constant byte address 0x4 - core index']
  #allocation1 [shape = 'u32[144,128]{1,0:T(1,128)}', space=vmem, size = 0x12000, scoped, tag = 'internal scratch']
  #allocation2 [shape = 'f32[2,256]{1,0:T(2,128)}', space=vmem, size = 0x800, scoped, tag = 'scratch operand']
  %s0 = inlined_call_operand.vmem [shape: f32[16,256], index: 0, kind: input, shape index: {}]
  %s1 = inlined_call_operand.vmem [shape: f32[768,256], index: 1, kind: input, shape index: {}]
  %s2 = inlined_call_operand.hbm [shape: f32[768,256], index: 2, kind: input, shape index: {}]
  %s3 = inlined_call_operand.vmem [shape: f32[256,4], index: 3, kind: input, shape index: {}]
  %s4 = inlined_call_operand.vmem [shape: f32[2,4,256], index: 4, kind: input, shape index: {}]
  %s5 = inlined_call_operand.vmem [shape: f32[2,256], index: 5, kind: input, shape index: {}]
  %s6 = inlined_call_operand.vmem [shape: f32[16,256], index: 6, kind: output, shape index: {}]
  %s7 = sld [smem:[#allocation0]]
  $region38: #{basic_block_apply.1} parent=0
    _
  %s9 = ssub.s32 1, %s7
  %s10 = scalar_select 0, %s9, %s7
  $region1: #{basic_block_apply.1} parent=0
    #allocation3 [shape = 'u8[786432]{0}', space=vmem, size = 0xc0000, scoped, tag = 'input window, operand 2, single buffered']
    #allocation4 [shape = 's32[1]{0}', space=sflag, size = 0x4, scoped, tag = 'scoped memory for basic_block_apply.1']
    %11 = vsyncpa [#allocation4], 0
    // Predicated region
    $region2: #{basic_block_apply.1} parent=1 // pred_check
      _
    $region3: #{basic_block_apply.1} parent=1 // pred_check_branch
      %13 = sbr.rel (0) target = $region5
    $region4: #{basic_block_apply.1} parent=1 // pred_region
      _
    $region5: #{basic_block_apply.1} parent=1 // pred_fallthru
      _
    // Predicated region
    $region6: #{basic_block_apply.1} parent=1 // pred_check
      _
    $region7: #{basic_block_apply.1} parent=1 // pred_check_branch
      %15 = sbr.rel (0) target = $region9
    $region8: #{basic_block_apply.1} parent=1 // pred_region
      _
    $region9: #{basic_block_apply.1} parent=1 // pred_fallthru
      _
    // Predicated region
    $region10: #{basic_block_apply.1} parent=1 // pred_check
      _
    $region11: #{basic_block_apply.1} parent=1 // pred_check_branch
      %17 = sbr.rel (0) target = $region13
    $region12: #{basic_block_apply.1} parent=1 // pred_region
      %s19 = ssub.s32 24576, 24576
      %20 = vsyncadd [#allocation4], %s19
      %s21 = sshll.u32 [#allocation3], 4
      %s22 = int_to_ptr.vmem [resolvable:$true] %s21
      %27 = dma.hbm_to_vmem [thread:$0]  %s2, 24576, %s22, [#allocation4], 256, 256, 16
    $region13: #{basic_block_apply.1} parent=1 // pred_fallthru
      _
    // Predicated region
    $region14: #{basic_block_apply.1} parent=1 // pred_check
      _
    $region15: #{basic_block_apply.1} parent=1 // pred_check_branch
      %29 = sbr.rel (0) target = $region17
    $region16: #{basic_block_apply.1} parent=1 // pred_region
      _
    $region17: #{basic_block_apply.1} parent=1 // pred_fallthru
      _
    // Predicated region
    $region18: #{basic_block_apply.1} parent=1 // pred_check
      _
    $region19: #{basic_block_apply.1} parent=1 // pred_check_branch
      %31 = sbr.rel (0) target = $region21
    $region20: #{basic_block_apply.1} parent=1 // pred_region
      _
    $region21: #{basic_block_apply.1} parent=1 // pred_fallthru
      _
    // Predicated region
    $region22: #{basic_block_apply.1} parent=1 // pred_check
      _
    $region23: #{basic_block_apply.1} parent=1 // pred_check_branch
      %33 = sbr.rel (0) target = $region25
    $region24: #{basic_block_apply.1} parent=1 // pred_region
      _
    $region25: #{basic_block_apply.1} parent=1 // pred_fallthru
      _
    // Predicated region
    $region26: #{basic_block_apply.1} parent=1 // pred_check
      _
    $region27: #{basic_block_apply.1} parent=1 // pred_check_branch
      %35 = sbr.rel (0) target = $region29
    $region28: #{basic_block_apply.1} parent=1 // pred_region
      %36 = dma.done [#allocation4], 24576
    $region29: #{basic_block_apply.1} parent=1 // pred_fallthru
      _
    %v37 = vld [vmem:[%s0] sm:$0xff]
    %v38 = vld [vmem:[%s0 + $0x8] sm:$0xff]
    %v39 = vld [vmem:[%s0 + $0x10] sm:$0xff]
    %v40 = vld [vmem:[%s0 + $0x18] sm:$0xff]
    %v41 = vlaneseq
    %v42 = vshrl.u32 %v41, 7
    %v43 = vadd.s32 %v42, 8
    %vm44 = vcmp.lt.s32.totalorder %v42, 0
    %v45 = vsub.s32 0, %v42
    %v46 = vsel %vm44, %v45, %v42
    %v47 = vshrl.u32 %v46, 3
    %v48 = vand.u32 %v46, 7
    %v49 = vsub.s32 0, %v48
    %v50 = vsel %vm44, %v49, %v48
    %vm51 = vcmp.lt.s32.totalorder %v43, 0
    %v52 = vsub.s32 0, %v43
    %v53 = vsel %vm51, %v52, %v43
    %v54 = vshrl.u32 %v53, 3
    %v55 = vand.u32 %v53, 7
    %v56 = vsub.s32 0, %v55
    %v57 = vsel %vm51, %v56, %v55
    %vm58 = vcmp.ne.s32.totalorder %v50, 0
    %vm59 = vcmp.ne.s32.totalorder %v57, 0
    %vm60 = vcmp.lt.s32.totalorder %v50, 0
    %vm61 = vcmp.lt.s32.totalorder %v57, 0
    %vm62 = vmand %vm60, %vm58
    %vm63 = vmand %vm61, %vm59
    %v64 = vadd.s32 %v50, 8
    %v65 = vadd.s32 %v57, 8
    %v66 = vsel %vm62, %v64, %v50
    %v67 = vsel %vm63, %v65, %v57
    %vm68 = vcmp.ne.s32.totalorder %v66, 0
    %vm69 = vcmp.ne.s32.totalorder %v67, 0
    %vm70 = vcmp.ne.s32.totalorder %v66, 7
    %vm71 = vcmp.ne.s32.totalorder %v67, 7
    %v72 = vrot.slane %v37, 7
    %v73 = vrot.slane %v38, 7
    %v74 = vrot.slane %v39, 7
    %v75 = vrot.slane %v40, 7
    %vm76 = vcmp.lt.s32.totalorder %v42, 1
    %v77 = vsel %vm76, %v72, %v74
    %v78 = vsel %vm76, %v73, %v75
    %v79 = vsel %vm76, %v74, %v72
    %v80 = vsel %vm76, %v75, %v73
    %v81 = vsel %vm68, 1, 0
    %v82 = vsel %vm69, 1, 0
    %vm83 = vcmp.eq.s32.totalorder %v81, 1
    %vm84 = vcmp.eq.s32.totalorder %v82, 1
    %v85 = vsel %vm83, %v79, 0.0
    %v86 = vsel %vm83, %v80, 0.0
    %v87 = vsel %vm84, %v77, 0.0
    %v88 = vsel %vm84, %v78, 0.0
    %v89 = vrot.slane %v37, 1
    %v90 = vrot.slane %v38, 1
    %v91 = vrot.slane %v39, 1
    %v92 = vrot.slane %v40, 1
    %vm93 = vcmp.lt.s32.totalorder %v42, 7
    %v94 = vsel %vm93, %v89, %v91
    %v95 = vsel %vm93, %v90, %v92
    %v96 = vsel %vm93, %v91, %v89
    %v97 = vsel %vm93, %v92, %v90
    %v98 = vsel %vm70, 1, 0
    %v99 = vsel %vm71, 1, 0
    %vm100 = vcmp.eq.s32.totalorder %v98, 1
    %vm101 = vcmp.eq.s32.totalorder %v99, 1
    %v102 = vsel %vm100, %v94, 0.0
    %v103 = vsel %vm100, %v95, 0.0
    %v104 = vsel %vm101, %v96, 0.0
    %v105 = vsel %vm101, %v97, 0.0
    %v106 = vld [vmem:[%s1] sm:$0xff]
    %v107 = vld [vmem:[%s1 + $0x8] sm:$0xff]
    %v108 = vld [vmem:[%s1 + $0x10] sm:$0xff]
    %v109 = vld [vmem:[%s1 + $0x18] sm:$0xff]
    %v110 = vld [vmem:[%s1 + $0x20] sm:$0xff]
    %v111 = vld [vmem:[%s1 + $0x28] sm:$0xff]
    %v112 = vld [vmem:[%s1 + $0x30] sm:$0xff]
    %v113 = vld [vmem:[%s1 + $0x38] sm:$0xff]
    %v114 = vld [vmem:[%s1 + $0x40] sm:$0xff]
    %v115 = vld [vmem:[%s1 + $0x48] sm:$0xff]
    %v116 = vld [vmem:[%s1 + $0x50] sm:$0xff]
    %v117 = vld [vmem:[%s1 + $0x58] sm:$0xff]
    %v118 = vld [vmem:[%s1 + $0x60] sm:$0xff]
    %v119 = vld [vmem:[%s1 + $0x68] sm:$0xff]
    %v120 = vld [vmem:[%s1 + $0x70] sm:$0xff]
    %v121 = vld [vmem:[%s1 + $0x78] sm:$0xff]
    %v122 = vld [vmem:[%s1 + $0x80] sm:$0xff]
    %v123 = vld [vmem:[%s1 + $0x88] sm:$0xff]
    %v124 = vld [vmem:[%s1 + $0x90] sm:$0xff]
    %v125 = vld [vmem:[%s1 + $0x98] sm:$0xff]
    %v126 = vld [vmem:[%s1 + $0xa0] sm:$0xff]
    %v127 = vld [vmem:[%s1 + $0xa8] sm:$0xff]
    %v128 = vld [vmem:[%s1 + $0xb0] sm:$0xff]
    %v129 = vld [vmem:[%s1 + $0xb8] sm:$0xff]
    %v130 = vld [vmem:[%s1 + $0xc0] sm:$0xff]
    %v131 = vld [vmem:[%s1 + $0xc8] sm:$0xff]
    %v132 = vld [vmem:[%s1 + $0xd0] sm:$0xff]
    %v133 = vld [vmem:[%s1 + $0xd8] sm:$0xff]
    %v134 = vld [vmem:[%s1 + $0xe0] sm:$0xff]
    %v135 = vld [vmem:[%s1 + $0xe8] sm:$0xff]
    %v136 = vld [vmem:[%s1 + $0xf0] sm:$0xff]
    %v137 = vld [vmem:[%s1 + $0xf8] sm:$0xff]
    %v138 = vld [vmem:[%s1 + $0x100] sm:$0xff]
    %v139 = vld [vmem:[%s1 + $0x108] sm:$0xff]
    %v140 = vld [vmem:[%s1 + $0x110] sm:$0xff]
    %v141 = vld [vmem:[%s1 + $0x118] sm:$0xff]
    %v142 = vld [vmem:[%s1 + $0x120] sm:$0xff]
    %v143 = vld [vmem:[%s1 + $0x128] sm:$0xff]
    %v144 = vld [vmem:[%s1 + $0x130] sm:$0xff]
    %v145 = vld [vmem:[%s1 + $0x138] sm:$0xff]
    %v146 = vld [vmem:[%s1 + $0x140] sm:$0xff]
    %v147 = vld [vmem:[%s1 + $0x148] sm:$0xff]
    %v148 = vld [vmem:[%s1 + $0x150] sm:$0xff]
    %v149 = vld [vmem:[%s1 + $0x158] sm:$0xff]
    %v150 = vld [vmem:[%s1 + $0x160] sm:$0xff]
    %v151 = vld [vmem:[%s1 + $0x168] sm:$0xff]
    %v152 = vld [vmem:[%s1 + $0x170] sm:$0xff]
    %v153 = vld [vmem:[%s1 + $0x178] sm:$0xff]
    %v154 = vld [vmem:[%s1 + $0x180] sm:$0xff]
    %v155 = vld [vmem:[%s1 + $0x188] sm:$0xff]
    %v156 = vld [vmem:[%s1 + $0x190] sm:$0xff]
    %v157 = vld [vmem:[%s1 + $0x198] sm:$0xff]
    %v158 = vld [vmem:[%s1 + $0x1a0] sm:$0xff]
    %v159 = vld [vmem:[%s1 + $0x1a8] sm:$0xff]
    %v160 = vld [vmem:[%s1 + $0x1b0] sm:$0xff]
    %v161 = vld [vmem:[%s1 + $0x1b8] sm:$0xff]
    %v162 = vld [vmem:[%s1 + $0x1c0] sm:$0xff]
    %v163 = vld [vmem:[%s1 + $0x1c8] sm:$0xff]
    %v164 = vld [vmem:[%s1 + $0x1d0] sm:$0xff]
    %v165 = vld [vmem:[%s1 + $0x1d8] sm:$0xff]
    %v166 = vld [vmem:[%s1 + $0x1e0] sm:$0xff]
    %v167 = vld [vmem:[%s1 + $0x1e8] sm:$0xff]
    %v168 = vld [vmem:[%s1 + $0x1f0] sm:$0xff]
    %v169 = vld [vmem:[%s1 + $0x1f8] sm:$0xff]
    %v170 = vld [vmem:[%s1 + $0x200] sm:$0xff]
    %v171 = vld [vmem:[%s1 + $0x208] sm:$0xff]
    %v172 = vld [vmem:[%s1 + $0x210] sm:$0xff]
    %v173 = vld [vmem:[%s1 + $0x218] sm:$0xff]
    %v174 = vld [vmem:[%s1 + $0x220] sm:$0xff]
    %v175 = vld [vmem:[%s1 + $0x228] sm:$0xff]
    %v176 = vld [vmem:[%s1 + $0x230] sm:$0xff]
    %v177 = vld [vmem:[%s1 + $0x238] sm:$0xff]
    %v178 = vld [vmem:[%s1 + $0x240] sm:$0xff]
    %v179 = vld [vmem:[%s1 + $0x248] sm:$0xff]
    %v180 = vld [vmem:[%s1 + $0x250] sm:$0xff]
    %v181 = vld [vmem:[%s1 + $0x258] sm:$0xff]
    %v182 = vld [vmem:[%s1 + $0x260] sm:$0xff]
    %v183 = vld [vmem:[%s1 + $0x268] sm:$0xff]
    %v184 = vld [vmem:[%s1 + $0x270] sm:$0xff]
    %v185 = vld [vmem:[%s1 + $0x278] sm:$0xff]
    %v186 = vld [vmem:[%s1 + $0x280] sm:$0xff]
    %v187 = vld [vmem:[%s1 + $0x288] sm:$0xff]
    %v188 = vld [vmem:[%s1 + $0x290] sm:$0xff]
    %v189 = vld [vmem:[%s1 + $0x298] sm:$0xff]
    %v190 = vld [vmem:[%s1 + $0x2a0] sm:$0xff]
    %v191 = vld [vmem:[%s1 + $0x2a8] sm:$0xff]
    %v192 = vld [vmem:[%s1 + $0x2b0] sm:$0xff]
    %v193 = vld [vmem:[%s1 + $0x2b8] sm:$0xff]
    %v194 = vld [vmem:[%s1 + $0x2c0] sm:$0xff]
    %v195 = vld [vmem:[%s1 + $0x2c8] sm:$0xff]
    %v196 = vld [vmem:[%s1 + $0x2d0] sm:$0xff]
    %v197 = vld [vmem:[%s1 + $0x2d8] sm:$0xff]
    %v198 = vld [vmem:[%s1 + $0x2e0] sm:$0xff]
    %v199 = vld [vmem:[%s1 + $0x2e8] sm:$0xff]
    %v200 = vld [vmem:[%s1 + $0x2f0] sm:$0xff]
    %v201 = vld [vmem:[%s1 + $0x2f8] sm:$0xff]
    %v202 = vld [vmem:[%s1 + $0x300] sm:$0xff]
    %v203 = vld [vmem:[%s1 + $0x308] sm:$0xff]
    %v204 = vld [vmem:[%s1 + $0x310] sm:$0xff]
    %v205 = vld [vmem:[%s1 + $0x318] sm:$0xff]
    %v206 = vld [vmem:[%s1 + $0x320] sm:$0xff]
    %v207 = vld [vmem:[%s1 + $0x328] sm:$0xff]
    %v208 = vld [vmem:[%s1 + $0x330] sm:$0xff]
    %v209 = vld [vmem:[%s1 + $0x338] sm:$0xff]
    %v210 = vld [vmem:[%s1 + $0x340] sm:$0xff]
    %v211 = vld [vmem:[%s1 + $0x348] sm:$0xff]
    %v212 = vld [vmem:[%s1 + $0x350] sm:$0xff]
    %v213 = vld [vmem:[%s1 + $0x358] sm:$0xff]
    %v214 = vld [vmem:[%s1 + $0x360] sm:$0xff]
    %v215 = vld [vmem:[%s1 + $0x368] sm:$0xff]
    %v216 = vld [vmem:[%s1 + $0x370] sm:$0xff]
    %v217 = vld [vmem:[%s1 + $0x378] sm:$0xff]
    %v218 = vld [vmem:[%s1 + $0x380] sm:$0xff]
    %v219 = vld [vmem:[%s1 + $0x388] sm:$0xff]
    %v220 = vld [vmem:[%s1 + $0x390] sm:$0xff]
    %v221 = vld [vmem:[%s1 + $0x398] sm:$0xff]
    %v222 = vld [vmem:[%s1 + $0x3a0] sm:$0xff]
    %v223 = vld [vmem:[%s1 + $0x3a8] sm:$0xff]
    %v224 = vld [vmem:[%s1 + $0x3b0] sm:$0xff]
    %v225 = vld [vmem:[%s1 + $0x3b8] sm:$0xff]
    %v226 = vld [vmem:[%s1 + $0x3c0] sm:$0xff]
    %v227 = vld [vmem:[%s1 + $0x3c8] sm:$0xff]
    %v228 = vld [vmem:[%s1 + $0x3d0] sm:$0xff]
    %v229 = vld [vmem:[%s1 + $0x3d8] sm:$0xff]
    %v230 = vld [vmem:[%s1 + $0x3e0] sm:$0xff]
    %v231 = vld [vmem:[%s1 + $0x3e8] sm:$0xff]
    %v232 = vld [vmem:[%s1 + $0x3f0] sm:$0xff]
    %v233 = vld [vmem:[%s1 + $0x3f8] sm:$0xff]
    %v234 = vld [vmem:[%s1 + $0x400] sm:$0xff]
    %v235 = vld [vmem:[%s1 + $0x408] sm:$0xff]
    %v236 = vld [vmem:[%s1 + $0x410] sm:$0xff]
    %v237 = vld [vmem:[%s1 + $0x418] sm:$0xff]
    %v238 = vld [vmem:[%s1 + $0x420] sm:$0xff]
    %v239 = vld [vmem:[%s1 + $0x428] sm:$0xff]
    %v240 = vld [vmem:[%s1 + $0x430] sm:$0xff]
    %v241 = vld [vmem:[%s1 + $0x438] sm:$0xff]
    %v242 = vld [vmem:[%s1 + $0x440] sm:$0xff]
    %v243 = vld [vmem:[%s1 + $0x448] sm:$0xff]
    %v244 = vld [vmem:[%s1 + $0x450] sm:$0xff]
    %v245 = vld [vmem:[%s1 + $0x458] sm:$0xff]
    %v246 = vld [vmem:[%s1 + $0x460] sm:$0xff]
    %v247 = vld [vmem:[%s1 + $0x468] sm:$0xff]
    %v248 = vld [vmem:[%s1 + $0x470] sm:$0xff]
    %v249 = vld [vmem:[%s1 + $0x478] sm:$0xff]
    %v250 = vld [vmem:[%s1 + $0x480] sm:$0xff]
    %v251 = vld [vmem:[%s1 + $0x488] sm:$0xff]
    %v252 = vld [vmem:[%s1 + $0x490] sm:$0xff]
    %v253 = vld [vmem:[%s1 + $0x498] sm:$0xff]
    %v254 = vld [vmem:[%s1 + $0x4a0] sm:$0xff]
    %v255 = vld [vmem:[%s1 + $0x4a8] sm:$0xff]
    %v256 = vld [vmem:[%s1 + $0x4b0] sm:$0xff]
    %v257 = vld [vmem:[%s1 + $0x4b8] sm:$0xff]
    %v258 = vld [vmem:[%s1 + $0x4c0] sm:$0xff]
    %v259 = vld [vmem:[%s1 + $0x4c8] sm:$0xff]
    %v260 = vld [vmem:[%s1 + $0x4d0] sm:$0xff]
    %v261 = vld [vmem:[%s1 + $0x4d8] sm:$0xff]
    %v262 = vld [vmem:[%s1 + $0x4e0] sm:$0xff]
    %v263 = vld [vmem:[%s1 + $0x4e8] sm:$0xff]
    %v264 = vld [vmem:[%s1 + $0x4f0] sm:$0xff]
    %v265 = vld [vmem:[%s1 + $0x4f8] sm:$0xff]
    %v266 = vld [vmem:[%s1 + $0x500] sm:$0xff]
    %v267 = vld [vmem:[%s1 + $0x508] sm:$0xff]
    %v268 = vld [vmem:[%s1 + $0x510] sm:$0xff]
    %v269 = vld [vmem:[%s1 + $0x518] sm:$0xff]
    %v270 = vld [vmem:[%s1 + $0x520] sm:$0xff]
    %v271 = vld [vmem:[%s1 + $0x528] sm:$0xff]
    %v272 = vld [vmem:[%s1 + $0x530] sm:$0xff]
    %v273 = vld [vmem:[%s1 + $0x538] sm:$0xff]
    %v274 = vld [vmem:[%s1 + $0x540] sm:$0xff]
    %v275 = vld [vmem:[%s1 + $0x548] sm:$0xff]
    %v276 = vld [vmem:[%s1 + $0x550] sm:$0xff]
    %v277 = vld [vmem:[%s1 + $0x558] sm:$0xff]
    %v278 = vld [vmem:[%s1 + $0x560] sm:$0xff]
    %v279 = vld [vmem:[%s1 + $0x568] sm:$0xff]
    %v280 = vld [vmem:[%s1 + $0x570] sm:$0xff]
    %v281 = vld [vmem:[%s1 + $0x578] sm:$0xff]
    %v282 = vld [vmem:[%s1 + $0x580] sm:$0xff]
    %v283 = vld [vmem:[%s1 + $0x588] sm:$0xff]
    %v284 = vld [vmem:[%s1 + $0x590] sm:$0xff]
    %v285 = vld [vmem:[%s1 + $0x598] sm:$0xff]
    %v286 = vld [vmem:[%s1 + $0x5a0] sm:$0xff]
    %v287 = vld [vmem:[%s1 + $0x5a8] sm:$0xff]
    %v288 = vld [vmem:[%s1 + $0x5b0] sm:$0xff]
    %v289 = vld [vmem:[%s1 + $0x5b8] sm:$0xff]
    %v290 = vld [vmem:[%s1 + $0x5c0] sm:$0xff]
    %v291 = vld [vmem:[%s1 + $0x5c8] sm:$0xff]
    %v292 = vld [vmem:[%s1 + $0x5d0] sm:$0xff]
    %v293 = vld [vmem:[%s1 + $0x5d8] sm:$0xff]
    %v294 = vld [vmem:[%s1 + $0x5e0] sm:$0xff]
    %v295 = vld [vmem:[%s1 + $0x5e8] sm:$0xff]
    %v296 = vld [vmem:[%s1 + $0x5f0] sm:$0xff]
    %v297 = vld [vmem:[%s1 + $0x5f8] sm:$0xff]
    %298 = vmatprep.subr.mxu0 %v107
    %299 = vmatpush1.msra.mxu0 %v106
    %300 = vmatprep.subr.mxu0 %v109
    %301 = vmatpush1.msra.mxu0 %v108
    %302 = vmatprep.subr.mxu0 %v111
    %303 = vmatpush1.msra.mxu0 %v110
    %304 = vmatprep.subr.mxu0 %v113
    %305 = vmatpush1.msra.mxu0 %v112
    %306 = vmatprep.subr.mxu0 %v115
    %307 = vmatpush1.msra.mxu0 %v114
    %308 = vmatprep.subr.mxu0 %v117
    %309 = vmatpush1.msra.mxu0 %v116
    %310 = vmatprep.subr.mxu0 %v119
    %311 = vmatpush1.msra.mxu0 %v118
    %312 = vmatprep.subr.mxu0 %v121
    %313 = vmatpush1.msra.mxu0 %v120
    %314 = vmatprep.subr.mxu0 %v123
    %315 = vmatpush1.msra.mxu0 %v122
    %316 = vmatprep.subr.mxu0 %v125
    %317 = vmatpush1.msra.mxu0 %v124
    %318 = vmatprep.subr.mxu0 %v127
    %319 = vmatpush1.msra.mxu0 %v126
    %320 = vmatprep.subr.mxu0 %v129
    %321 = vmatpush1.msra.mxu0 %v128
    %322 = vmatprep.subr.mxu0 %v131
    %323 = vmatpush1.msra.mxu0 %v130
    %324 = vmatprep.subr.mxu0 %v133
    %325 = vmatpush1.msra.mxu0 %v132
    %326 = vmatprep.subr.mxu0 %v135
    %327 = vmatpush1.msra.mxu0 %v134
    %328 = vmatprep.subr.mxu0 %v137
    %329 = vmatpush1.msra.mxu0 %v136
    %330 = vmatprep.subr.mxu0 %v139
    %331 = vmatpush1.msra.mxu0 %v138
    %332 = vmatprep.subr.mxu0 %v141
    %333 = vmatpush1.msra.mxu0 %v140
    %334 = vmatprep.subr.mxu0 %v143
    %335 = vmatpush1.msra.mxu0 %v142
    %336 = vmatprep.subr.mxu0 %v145
    %337 = vmatpush1.msra.mxu0 %v144
    %338 = vmatprep.subr.mxu0 %v147
    %339 = vmatpush1.msra.mxu0 %v146
    %340 = vmatprep.subr.mxu0 %v149
    %341 = vmatpush1.msra.mxu0 %v148
    %342 = vmatprep.subr.mxu0 %v151
    %343 = vmatpush1.msra.mxu0 %v150
    %344 = vmatprep.subr.mxu0 %v153
    %345 = vmatpush1.msra.mxu0 %v152
    %346 = vmatprep.subr.mxu0 %v155
    %347 = vmatpush1.msra.mxu0 %v154
    %348 = vmatprep.subr.mxu0 %v157
    %349 = vmatpush1.msra.mxu0 %v156
    %350 = vmatprep.subr.mxu0 %v159
    %351 = vmatpush1.msra.mxu0 %v158
    %352 = vmatprep.subr.mxu0 %v161
    %353 = vmatpush1.msra.mxu0 %v160
    %354 = vmatprep.subr.mxu0 %v163
    %355 = vmatpush1.msra.mxu0 %v162
    %356 = vmatprep.subr.mxu0 %v165
    %357 = vmatpush1.msra.mxu0 %v164
    %358 = vmatprep.subr.mxu0 %v167
    %359 = vmatpush1.msra.mxu0 %v166
    %360 = vmatprep.subr.mxu0 %v169
    %361 = vmatpush1.msra.mxu0 %v168
    %362 = vmatprep.mubr.f32.mxu0 %v86
    %363 = vmatmul.mubr.f32.gmra.mrb[0].mxu0 %v85
    %v364 = vpop.f32.mrb[0].mxu0
    %v365 = vadd.f32 0.0, %v364
    %v366 = vpop.f32.mrb[0].mxu0
    %v367 = vadd.f32 0.0, %v366
    %368 = vmatprep.mubr.f32.mxu0 %v88
    %369 = vmatmul.mubr.f32.gmra.mrb[0].mxu0 %v87
    %v370 = vpop.f32.mrb[0].mxu0
    %v371 = vadd.f32 0.0, %v370
    %v372 = vpop.f32.mrb[0].mxu0
    %v373 = vadd.f32 0.0, %v372
    %374 = vdwg.mxu0
    %375 = vmatprep.subr.mxu0 %v171
    %376 = vmatpush1.msra.mxu0 %v170
    %377 = vmatprep.subr.mxu0 %v173
    %378 = vmatpush1.msra.mxu0 %v172
    %379 = vmatprep.subr.mxu0 %v175
    %380 = vmatpush1.msra.mxu0 %v174
    %381 = vmatprep.subr.mxu0 %v177
    %382 = vmatpush1.msra.mxu0 %v176
    %383 = vmatprep.subr.mxu0 %v179
    %384 = vmatpush1.msra.mxu0 %v178
    %385 = vmatprep.subr.mxu0 %v181
    %386 = vmatpush1.msra.mxu0 %v180
    %387 = vmatprep.subr.mxu0 %v183
    %388 = vmatpush1.msra.mxu0 %v182
    %389 = vmatprep.subr.mxu0 %v185
    %390 = vmatpush1.msra.mxu0 %v184
    %391 = vmatprep.subr.mxu0 %v187
    %392 = vmatpush1.msra.mxu0 %v186
    %393 = vmatprep.subr.mxu0 %v189
    %394 = vmatpush1.msra.mxu0 %v188
    %395 = vmatprep.subr.mxu0 %v191
    %396 = vmatpush1.msra.mxu0 %v190
    %397 = vmatprep.subr.mxu0 %v193
    %398 = vmatpush1.msra.mxu0 %v192
    %399 = vmatprep.subr.mxu0 %v195
    %400 = vmatpush1.msra.mxu0 %v194
    %401 = vmatprep.subr.mxu0 %v197
    %402 = vmatpush1.msra.mxu0 %v196
    %403 = vmatprep.subr.mxu0 %v199
    %404 = vmatpush1.msra.mxu0 %v198
    %405 = vmatprep.subr.mxu0 %v201
    %406 = vmatpush1.msra.mxu0 %v200
    %407 = vmatprep.subr.mxu0 %v203
    %408 = vmatpush1.msra.mxu0 %v202
    %409 = vmatprep.subr.mxu0 %v205
    %410 = vmatpush1.msra.mxu0 %v204
    %411 = vmatprep.subr.mxu0 %v207
    %412 = vmatpush1.msra.mxu0 %v206
    %413 = vmatprep.subr.mxu0 %v209
    %414 = vmatpush1.msra.mxu0 %v208
    %415 = vmatprep.subr.mxu0 %v211
    %416 = vmatpush1.msra.mxu0 %v210
    %417 = vmatprep.subr.mxu0 %v213
    %418 = vmatpush1.msra.mxu0 %v212
    %419 = vmatprep.subr.mxu0 %v215
    %420 = vmatpush1.msra.mxu0 %v214
    %421 = vmatprep.subr.mxu0 %v217
    %422 = vmatpush1.msra.mxu0 %v216
    %423 = vmatprep.subr.mxu0 %v219
    %424 = vmatpush1.msra.mxu0 %v218
    %425 = vmatprep.subr.mxu0 %v221
    %426 = vmatpush1.msra.mxu0 %v220
    %427 = vmatprep.subr.mxu0 %v223
    %428 = vmatpush1.msra.mxu0 %v222
    %429 = vmatprep.subr.mxu0 %v225
    %430 = vmatpush1.msra.mxu0 %v224
    %431 = vmatprep.subr.mxu0 %v227
    %432 = vmatpush1.msra.mxu0 %v226
    %433 = vmatprep.subr.mxu0 %v229
    %434 = vmatpush1.msra.mxu0 %v228
    %435 = vmatprep.subr.mxu0 %v231
    %436 = vmatpush1.msra.mxu0 %v230
    %437 = vmatprep.subr.mxu0 %v233
    %438 = vmatpush1.msra.mxu0 %v232
    %439 = vmatprep.mubr.f32.mxu0 %v38
    %440 = vmatmul.mubr.f32.gmra.mrb[0].mxu0 %v37
    %v441 = vpop.f32.mrb[0].mxu0
    %v442 = vadd.f32 %v365, %v441
    %v443 = vpop.f32.mrb[0].mxu0
    %v444 = vadd.f32 %v367, %v443
    %445 = vmatprep.mubr.f32.mxu0 %v40
    %446 = vmatmul.mubr.f32.gmra.mrb[0].mxu0 %v39
    %v447 = vpop.f32.mrb[0].mxu0
    %v448 = vadd.f32 %v371, %v447
    %v449 = vpop.f32.mrb[0].mxu0
    %v450 = vadd.f32 %v373, %v449
    %451 = vdwg.mxu0
    %452 = vmatprep.subr.mxu0 %v235
    %453 = vmatpush1.msra.mxu0 %v234
    %454 = vmatprep.subr.mxu0 %v237
    %455 = vmatpush1.msra.mxu0 %v236
    %456 = vmatprep.subr.mxu0 %v239
    %457 = vmatpush1.msra.mxu0 %v238
    %458 = vmatprep.subr.mxu0 %v241
    %459 = vmatpush1.msra.mxu0 %v240
    %460 = vmatprep.subr.mxu0 %v243
    %461 = vmatpush1.msra.mxu0 %v242
    %462 = vmatprep.subr.mxu0 %v245
    %463 = vmatpush1.msra.mxu0 %v244
    %464 = vmatprep.subr.mxu0 %v247
    %465 = vmatpush1.msra.mxu0 %v246
    %466 = vmatprep.subr.mxu0 %v249
    %467 = vmatpush1.msra.mxu0 %v248
    %468 = vmatprep.subr.mxu0 %v251
    %469 = vmatpush1.msra.mxu0 %v250
    %470 = vmatprep.subr.mxu0 %v253
    %471 = vmatpush1.msra.mxu0 %v252
    %472 = vmatprep.subr.mxu0 %v255
    %473 = vmatpush1.msra.mxu0 %v254
    %474 = vmatprep.subr.mxu0 %v257
    %475 = vmatpush1.msra.mxu0 %v256
    %476 = vmatprep.subr.mxu0 %v259
    %477 = vmatpush1.msra.mxu0 %v258
    %478 = vmatprep.subr.mxu0 %v261
    %479 = vmatpush1.msra.mxu0 %v260
    %480 = vmatprep.subr.mxu0 %v263
    %481 = vmatpush1.msra.mxu0 %v262
    %482 = vmatprep.subr.mxu0 %v265
    %483 = vmatpush1.msra.mxu0 %v264
    %484 = vmatprep.subr.mxu0 %v267
    %485 = vmatpush1.msra.mxu0 %v266
    %486 = vmatprep.subr.mxu0 %v269
    %487 = vmatpush1.msra.mxu0 %v268
    %488 = vmatprep.subr.mxu0 %v271
    %489 = vmatpush1.msra.mxu0 %v270
    %490 = vmatprep.subr.mxu0 %v273
    %491 = vmatpush1.msra.mxu0 %v272
    %492 = vmatprep.subr.mxu0 %v275
    %493 = vmatpush1.msra.mxu0 %v274
    %494 = vmatprep.subr.mxu0 %v277
    %495 = vmatpush1.msra.mxu0 %v276
    %496 = vmatprep.subr.mxu0 %v279
    %497 = vmatpush1.msra.mxu0 %v278
    %498 = vmatprep.subr.mxu0 %v281
    %499 = vmatpush1.msra.mxu0 %v280
    %500 = vmatprep.subr.mxu0 %v283
    %501 = vmatpush1.msra.mxu0 %v282
    %502 = vmatprep.subr.mxu0 %v285
    %503 = vmatpush1.msra.mxu0 %v284
    %504 = vmatprep.subr.mxu0 %v287
    %505 = vmatpush1.msra.mxu0 %v286
    %506 = vmatprep.subr.mxu0 %v289
    %507 = vmatpush1.msra.mxu0 %v288
    %508 = vmatprep.subr.mxu0 %v291
    %509 = vmatpush1.msra.mxu0 %v290
    %510 = vmatprep.subr.mxu0 %v293
    %511 = vmatpush1.msra.mxu0 %v292
    %512 = vmatprep.subr.mxu0 %v295
    %513 = vmatpush1.msra.mxu0 %v294
    %514 = vmatprep.subr.mxu0 %v297
    %515 = vmatpush1.msra.mxu0 %v296
    %516 = vmatprep.mubr.f32.mxu0 %v103
    %517 = vmatmul.mubr.f32.gmra.mrb[0].mxu0 %v102
    %v518 = vpop.f32.mrb[0].mxu0
    %v519 = vadd.f32 %v442, %v518
    %v520 = vpop.f32.mrb[0].mxu0
    %v521 = vadd.f32 %v444, %v520
    %522 = vmatprep.mubr.f32.mxu0 %v105
    %523 = vmatmul.mubr.f32.gmra.mrb[0].mxu0 %v104
    %v524 = vpop.f32.mrb[0].mxu0
    %v525 = vadd.f32 %v448, %v524
    %v526 = vpop.f32.mrb[0].mxu0
    %v527 = vadd.f32 %v450, %v526
    %528 = vdwg.mxu0
    %v529 = vadd.f32 %v519, %v525
    %v530 = vrot.slane %v529, 4
    %v531 = vadd.f32 %v529, %v530
    %v532 = vrot.slane %v531, 2
    %v533 = vadd.f32 %v531, %v532
    %v534 = vrot.slane %v533, 1
    %v535 = vadd.f32 %v533, %v534
    %v536 = vadd.f32 %v521, %v527
    %v537 = vrot.slane %v536, 4
    %v538 = vadd.f32 %v536, %v537
    %v539 = vrot.slane %v538, 2
    %v540 = vadd.f32 %v538, %v539
    %v541 = vrot.slane %v540, 1
    %v542 = vadd.f32 %v540, %v541
    %v545 = vcombine.low %v535, %v542
    %v547 = vunpack.c.l.s4 1966171168
    %v548 = vunpack.c.0.s8 %v547
    %v549 = vlaneseq
    %v550 = vshrl.u32 %v549, 7
    %v551 = vsub.s32 %v548, %v550
    %v552 = vrot.slane %v545, %v551
    %v554 = vunpack.c.l.s4 1966171168
    %v555 = vunpack.c.0.s8 %v554
    %v556 = vlaneseq
    %v557 = vshrl.u32 %v556, 7
    %v558 = vsub.s32 %v555, %v557
    %v559 = vrot.slane %v552, %v558
    %v561 = vlaneseq
    %vm562 = vcmp.ge.s32.totalorder %v561, 0
    %vm563 = vcmp.lt.s32.totalorder %v561, 256
    %vm564 = vmand %vm562, %vm563
    %565 = vst.msk [vmem:[#allocation2] ss:$2 sm:$0x3] %vm564, %v559
    %v566 = vmul.f32 %v519, %v519
    %v567 = vmul.f32 %v521, %v521
    %v568 = vmul.f32 %v525, %v525
    %v569 = vmul.f32 %v527, %v527
    %v570 = vadd.f32 %v566, %v568
    %v571 = vrot.slane %v570, 4
    %v572 = vadd.f32 %v570, %v571
    %v573 = vrot.slane %v572, 2
    %v574 = vadd.f32 %v572, %v573
    %v575 = vrot.slane %v574, 1
    %v576 = vadd.f32 %v574, %v575
    %v577 = vadd.f32 %v567, %v569
    %v578 = vrot.slane %v577, 4
    %v579 = vadd.f32 %v577, %v578
    %v580 = vrot.slane %v579, 2
    %v581 = vadd.f32 %v579, %v580
    %v582 = vrot.slane %v581, 1
    %v583 = vadd.f32 %v581, %v582
    %v586 = vcombine.low %v576, %v583
    %v588 = vunpack.c.l.s4 1966171168
    %v589 = vunpack.c.0.s8 %v588
    %v590 = vlaneseq
    %v591 = vshrl.u32 %v590, 7
    %v592 = vsub.s32 %v589, %v591
    %v593 = vrot.slane %v586, %v592
    %v595 = vunpack.c.l.s4 1966171168
    %v596 = vunpack.c.0.s8 %v595
    %v597 = vlaneseq
    %v598 = vshrl.u32 %v597, 7
    %v599 = vsub.s32 %v596, %v598
    %v600 = vrot.slane %v593, %v599
    %s602 = scalar_lea.vmem [#allocation2], 1
    %603 = vst.msk [vmem:[%s602] ss:$2 sm:$0x3] %vm564, %v600
    %v604 = vld [vmem:[#allocation2] sm:$0xf]
    %v605 = vld [vmem:[%s3] sm:$0xff]
    %v606 = vld [vmem:[%s3 + $0x8] sm:$0xff]
    %v607 = vld [vmem:[%s3 + $0x10] sm:$0xff]
    %v608 = vld [vmem:[%s3 + $0x18] sm:$0xff]
    %v609 = vld [vmem:[%s3 + $0x20] sm:$0xff]
    %v610 = vld [vmem:[%s3 + $0x28] sm:$0xff]
    %v611 = vld [vmem:[%s3 + $0x30] sm:$0xff]
    %v612 = vld [vmem:[%s3 + $0x38] sm:$0xff]
    %v613 = vld [vmem:[%s3 + $0x40] sm:$0xff]
    %v614 = vld [vmem:[%s3 + $0x48] sm:$0xff]
    %v615 = vld [vmem:[%s3 + $0x50] sm:$0xff]
    %v616 = vld [vmem:[%s3 + $0x58] sm:$0xff]
    %v617 = vld [vmem:[%s3 + $0x60] sm:$0xff]
    %v618 = vld [vmem:[%s3 + $0x68] sm:$0xff]
    %v619 = vld [vmem:[%s3 + $0x70] sm:$0xff]
    %v620 = vld [vmem:[%s3 + $0x78] sm:$0xff]
    %v621 = vld [vmem:[%s3 + $0x80] sm:$0xff]
    %v622 = vld [vmem:[%s3 + $0x88] sm:$0xff]
    %v623 = vld [vmem:[%s3 + $0x90] sm:$0xff]
    %v624 = vld [vmem:[%s3 + $0x98] sm:$0xff]
    %v625 = vld [vmem:[%s3 + $0xa0] sm:$0xff]
    %v626 = vld [vmem:[%s3 + $0xa8] sm:$0xff]
    %v627 = vld [vmem:[%s3 + $0xb0] sm:$0xff]
    %v628 = vld [vmem:[%s3 + $0xb8] sm:$0xff]
    %v629 = vld [vmem:[%s3 + $0xc0] sm:$0xff]
    %v630 = vld [vmem:[%s3 + $0xc8] sm:$0xff]
    %v631 = vld [vmem:[%s3 + $0xd0] sm:$0xff]
    %v632 = vld [vmem:[%s3 + $0xd8] sm:$0xff]
    %v633 = vld [vmem:[%s3 + $0xe0] sm:$0xff]
    %v634 = vld [vmem:[%s3 + $0xe8] sm:$0xff]
    %v635 = vld [vmem:[%s3 + $0xf0] sm:$0xff]
    %v636 = vld [vmem:[%s3 + $0xf8] sm:$0xff]
    %v639 = vunpack.c.l.s4 1983009808
    %v640 = vunpack.c.0.s8 %v639
    %v641 = vlaneseq
    %v642 = vshrl.u32 %v641, 7
    %v643 = vsub.s32 %v640, %v642
    %v644 = vrot.slane %v604, %v643
    %v645 = vcombine.high %v644, %v644
    %648 = vmatprep.subr.mxu0 0.0
    %649 = vmatpush1.msra.mxu0 %v605
    %650 = vmatprep.subr.mxu0 0.0
    %651 = vmatpush1.msra.mxu0 %v606
    %652 = vmatprep.subr.mxu0 0.0
    %653 = vmatpush1.msra.mxu0 %v607
    %654 = vmatprep.subr.mxu0 0.0
    %655 = vmatpush1.msra.mxu0 %v608
    %656 = vmatprep.subr.mxu0 0.0
    %657 = vmatpush1.msra.mxu0 %v609
    %658 = vmatprep.subr.mxu0 0.0
    %659 = vmatpush1.msra.mxu0 %v610
    %660 = vmatprep.subr.mxu0 0.0
    %661 = vmatpush1.msra.mxu0 %v611
    %662 = vmatprep.subr.mxu0 0.0
    %663 = vmatpush1.msra.mxu0 %v612
    %664 = vmatprep.subr.mxu0 0.0
    %665 = vmatpush1.msra.mxu0 %v613
    %666 = vmatprep.subr.mxu0 0.0
    %667 = vmatpush1.msra.mxu0 %v614
    %668 = vmatprep.subr.mxu0 0.0
    %669 = vmatpush1.msra.mxu0 %v615
    %670 = vmatprep.subr.mxu0 0.0
    %671 = vmatpush1.msra.mxu0 %v616
    %672 = vmatprep.subr.mxu0 0.0
    %673 = vmatpush1.msra.mxu0 %v617
    %674 = vmatprep.subr.mxu0 0.0
    %675 = vmatpush1.msra.mxu0 %v618
    %676 = vmatprep.subr.mxu0 0.0
    %677 = vmatpush1.msra.mxu0 %v619
    %678 = vmatprep.subr.mxu0 0.0
    %679 = vmatpush1.msra.mxu0 %v620
    %680 = vmatprep.subr.mxu0 0.0
    %681 = vmatpush1.msra.mxu0 %v621
    %682 = vmatprep.subr.mxu0 0.0
    %683 = vmatpush1.msra.mxu0 %v622
    %684 = vmatprep.subr.mxu0 0.0
    %685 = vmatpush1.msra.mxu0 %v623
    %686 = vmatprep.subr.mxu0 0.0
    %687 = vmatpush1.msra.mxu0 %v624
    %688 = vmatprep.subr.mxu0 0.0
    %689 = vmatpush1.msra.mxu0 %v625
    %690 = vmatprep.subr.mxu0 0.0
    %691 = vmatpush1.msra.mxu0 %v626
    %692 = vmatprep.subr.mxu0 0.0
    %693 = vmatpush1.msra.mxu0 %v627
    %694 = vmatprep.subr.mxu0 0.0
    %695 = vmatpush1.msra.mxu0 %v628
    %696 = vmatprep.subr.mxu0 0.0
    %697 = vmatpush1.msra.mxu0 %v629
    %698 = vmatprep.subr.mxu0 0.0
    %699 = vmatpush1.msra.mxu0 %v630
    %700 = vmatprep.subr.mxu0 0.0
    %701 = vmatpush1.msra.mxu0 %v631
    %702 = vmatprep.subr.mxu0 0.0
    %703 = vmatpush1.msra.mxu0 %v632
    %704 = vmatprep.subr.mxu0 0.0
    %705 = vmatpush1.msra.mxu0 %v633
    %706 = vmatprep.subr.mxu0 0.0
    %707 = vmatpush1.msra.mxu0 %v634
    %708 = vmatprep.subr.mxu0 0.0
    %709 = vmatpush1.msra.mxu0 %v635
    %710 = vmatprep.subr.mxu0 0.0
    %711 = vmatpush1.msra.mxu0 %v636
    %712 = vmatprep.mubr.f32.mxu0 %v645
    %713 = vmatmul.mubr.f32.gmra.mrb[0].mxu0 %v644
    %v714 = vpop.f32.mrb[0].mxu0
    %v715 = vadd.f32 0.0, %v714
    %v716 = vpop.f32.mrb[0].mxu0
    %717 = vdwg.mxu0
    %v718 = vmul.f32 %v715, %v715
    %v720 = vrot.slane %v718, 7
    %v722 = vsub.f32 %v715, %v720
    %v723 = vadd.f32 %v722, 1e-05
    %v724 = vrsqrt.pop %v723
    %vm725 = vcmp.eq.s32.totalorder %v42, 0
    %v726 = vsel %vm725, 1, 0
    %vm727 = vcmp.eq.s32.totalorder %v726, 1
    %v728 = vsel %vm727, %v715, 1.0
    %v729 = vlaneseq
    %v730 = vshrl.u32 %v729, 7
    %v731 = vsub.s32 1, %v730
    %v732 = vrot.slane %v724, %v731
    %v733 = vmul.f32 %v728, %v732
    %v734 = vld [vmem:[%s4] sm:$0xff]
    %v736 = vcombine.high %v734, %v734
    %vm737 = vcmask 31744
    %v739 = vsel %vm737, %v733, 0
    %vm741 = vcmask 1043456
    %v742 = vsel %vm741, %v734, 0
    %v744 = vsel %vm741, %v736, 0
    %746 = vmatprep.subr.mxu0 %v744
    %747 = vmatpush1.msra.mxu0 %v742
    %748 = vmatprep.subr.mxu0 0.0
    %749 = vmatpush1.msra.mxu0 0.0
    %750 = vmatprep.subr.mxu0 0.0
    %751 = vmatpush1.msra.mxu0 0.0
    %752 = vmatprep.subr.mxu0 0.0
    %753 = vmatpush1.msra.mxu0 0.0
    %754 = vmatprep.subr.mxu0 0.0
    %755 = vmatpush1.msra.mxu0 0.0
    %756 = vmatprep.subr.mxu0 0.0
    %757 = vmatpush1.msra.mxu0 0.0
    %758 = vmatprep.subr.mxu0 0.0
    %759 = vmatpush1.msra.mxu0 0.0
    %760 = vmatprep.subr.mxu0 0.0
    %761 = vmatpush1.msra.mxu0 0.0
    %762 = vmatprep.subr.mxu0 0.0
    %763 = vmatpush1.msra.mxu0 0.0
    %764 = vmatprep.subr.mxu0 0.0
    %765 = vmatpush1.msra.mxu0 0.0
    %766 = vmatprep.subr.mxu0 0.0
    %767 = vmatpush1.msra.mxu0 0.0
    %768 = vmatprep.subr.mxu0 0.0
    %769 = vmatpush1.msra.mxu0 0.0
    %770 = vmatprep.subr.mxu0 0.0
    %771 = vmatpush1.msra.mxu0 0.0
    %772 = vmatprep.subr.mxu0 0.0
    %773 = vmatpush1.msra.mxu0 0.0
    %774 = vmatprep.subr.mxu0 0.0
    %775 = vmatpush1.msra.mxu0 0.0
    %776 = vmatprep.subr.mxu0 0.0
    %777 = vmatpush1.msra.mxu0 0.0
    %778 = vmatprep.subr.mxu0 0.0
    %779 = vmatpush1.msra.mxu0 0.0
    %780 = vmatprep.subr.mxu0 0.0
    %781 = vmatpush1.msra.mxu0 0.0
    %782 = vmatprep.subr.mxu0 0.0
    %783 = vmatpush1.msra.mxu0 0.0
    %784 = vmatprep.subr.mxu0 0.0
    %785 = vmatpush1.msra.mxu0 0.0
    %786 = vmatprep.subr.mxu0 0.0
    %787 = vmatpush1.msra.mxu0 0.0
    %788 = vmatprep.subr.mxu0 0.0
    %789 = vmatpush1.msra.mxu0 0.0
    %790 = vmatprep.subr.mxu0 0.0
    %791 = vmatpush1.msra.mxu0 0.0
    %792 = vmatprep.subr.mxu0 0.0
    %793 = vmatpush1.msra.mxu0 0.0
    %794 = vmatprep.subr.mxu0 0.0
    %795 = vmatpush1.msra.mxu0 0.0
    %796 = vmatprep.subr.mxu0 0.0
    %797 = vmatpush1.msra.mxu0 0.0
    %798 = vmatprep.subr.mxu0 0.0
    %799 = vmatpush1.msra.mxu0 0.0
    %800 = vmatprep.subr.mxu0 0.0
    %801 = vmatpush1.msra.mxu0 0.0
    %802 = vmatprep.subr.mxu0 0.0
    %803 = vmatpush1.msra.mxu0 0.0
    %804 = vmatprep.subr.mxu0 0.0
    %805 = vmatpush1.msra.mxu0 0.0
    %806 = vmatprep.subr.mxu0 0.0
    %807 = vmatpush1.msra.mxu0 0.0
    %808 = vmatprep.subr.mxu0 0.0
    %809 = vmatpush1.msra.mxu0 0.0
    %810 = vmatprep.mubr.f32.mxu0 0.0
    %811 = vmatmul.mubr.f32.gmra.mrb[0].mxu0 %v739
    %v812 = vpop.f32.mrb[0].mxu0
    %v813 = vadd.f32 0.0, %v812
    %v814 = vpop.f32.mrb[0].mxu0
    %v815 = vadd.f32 0.0, %v814
    %816 = vdwg.mxu0
    %v817 = vld [vmem:[%s5] ss:$2 sm:$0x3]
    %v820 = vcombine.low %v813, %v815
    %v822 = vunpack.c.l.s4 1966171168
    %v823 = vunpack.c.0.s8 %v822
    %v824 = vlaneseq
    %v825 = vshrl.u32 %v824, 7
    %v826 = vsub.s32 %v823, %v825
    %v827 = vrot.slane %v820, %v826
    %v829 = vunpack.c.l.s4 1966171168
    %v830 = vunpack.c.0.s8 %v829
    %v831 = vlaneseq
    %v832 = vshrl.u32 %v831, 7
    %v833 = vsub.s32 %v830, %v832
    %v834 = vrot.slane %v827, %v833
    %v836 = vsub.f32 %v817, %v834
    %v837 = vlaneseq
    %v838 = vshrl.u32 %v837, 7
    %v839 = vsub.s32 1, %v838
    %v840 = vrot.slane %v813, %v839
    %v841 = vlaneseq
    %v842 = vshrl.u32 %v841, 7
    %v843 = vsub.s32 1, %v842
    %v844 = vrot.slane %v815, %v843
    %v845 = vmul.f32 %v519, %v840
    %v846 = vmul.f32 %v521, %v844
    %v847 = vmul.f32 %v525, %v840
    %v848 = vmul.f32 %v527, %v844
    %v850 = vlaneseq
    %v851 = vshrl.u32 %v850, 7
    %v852 = vsub.s32 0, %v851
    %v853 = vrot.slane %v836, %v852
    %v854 = vlaneseq
    %v855 = vshrl.u32 %v854, 7
    %v856 = vsub.s32 1, %v855
    %v857 = vrot.slane %v836, %v856
    %v860 = vadd.f32 %v845, %v853
    %v861 = vadd.f32 %v846, %v857
    %v862 = vadd.f32 %v847, %v853
    %v863 = vadd.f32 %v848, %v857
    %v864 = vmax.f32 %v860, 0.0
    %v865 = vmax.f32 %v861, 0.0
    %v866 = vmax.f32 %v862, 0.0
    %v867 = vmax.f32 %v863, 0.0
    %v868 = vrot.slane %v864, 7
    %v869 = vrot.slane %v865, 7
    %v870 = vrot.slane %v866, 7
    %v871 = vrot.slane %v867, 7
    %v872 = vsel %vm76, %v868, %v870
    %v873 = vsel %vm76, %v869, %v871
    %v874 = vsel %vm76, %v870, %v868
    %v875 = vsel %vm76, %v871, %v869
    %v876 = vsel %vm83, %v874, 0.0
    %v877 = vsel %vm83, %v875, 0.0
    %v878 = vsel %vm84, %v872, 0.0
    %v879 = vsel %vm84, %v873, 0.0
    %v880 = vrot.slane %v864, 1
    %v881 = vrot.slane %v865, 1
    %v882 = vrot.slane %v866, 1
    %v883 = vrot.slane %v867, 1
    %v884 = vsel %vm93, %v880, %v882
    %v885 = vsel %vm93, %v881, %v883
    %v886 = vsel %vm93, %v882, %v880
    %v887 = vsel %vm93, %v883, %v881
    %v888 = vsel %vm100, %v884, 0.0
    %v889 = vsel %vm100, %v885, 0.0
    %v890 = vsel %vm101, %v886, 0.0
    %v891 = vsel %vm101, %v887, 0.0
    %v892 = vld [vmem:[#allocation3] sm:$0xff]
    %v893 = vld [vmem:[#allocation3 + $0x8] sm:$0xff]
    %v894 = vld [vmem:[#allocation3 + $0x10] sm:$0xff]
    %v895 = vld [vmem:[#allocation3 + $0x18] sm:$0xff]
    %v896 = vld [vmem:[#allocation3 + $0x20] sm:$0xff]
    %v897 = vld [vmem:[#allocation3 + $0x28] sm:$0xff]
    %v898 = vld [vmem:[#allocation3 + $0x30] sm:$0xff]
    %v899 = vld [vmem:[#allocation3 + $0x38] sm:$0xff]
    %v900 = vld [vmem:[#allocation3 + $0x40] sm:$0xff]
    %v901 = vld [vmem:[#allocation3 + $0x48] sm:$0xff]
    %v902 = vld [vmem:[#allocation3 + $0x50] sm:$0xff]
    %v903 = vld [vmem:[#allocation3 + $0x58] sm:$0xff]
    %v904 = vld [vmem:[#allocation3 + $0x60] sm:$0xff]
    %v905 = vld [vmem:[#allocation3 + $0x68] sm:$0xff]
    %v906 = vld [vmem:[#allocation3 + $0x70] sm:$0xff]
    %v907 = vld [vmem:[#allocation3 + $0x78] sm:$0xff]
    %v908 = vld [vmem:[#allocation3 + $0x80] sm:$0xff]
    %v909 = vld [vmem:[#allocation3 + $0x88] sm:$0xff]
    %v910 = vld [vmem:[#allocation3 + $0x90] sm:$0xff]
    %v911 = vld [vmem:[#allocation3 + $0x98] sm:$0xff]
    %v912 = vld [vmem:[#allocation3 + $0xa0] sm:$0xff]
    %v913 = vld [vmem:[#allocation3 + $0xa8] sm:$0xff]
    %v914 = vld [vmem:[#allocation3 + $0xb0] sm:$0xff]
    %v915 = vld [vmem:[#allocation3 + $0xb8] sm:$0xff]
    %v916 = vld [vmem:[#allocation3 + $0xc0] sm:$0xff]
    %v917 = vld [vmem:[#allocation3 + $0xc8] sm:$0xff]
    %v918 = vld [vmem:[#allocation3 + $0xd0] sm:$0xff]
    %v919 = vld [vmem:[#allocation3 + $0xd8] sm:$0xff]
    %v920 = vld [vmem:[#allocation3 + $0xe0] sm:$0xff]
    %v921 = vld [vmem:[#allocation3 + $0xe8] sm:$0xff]
    %v922 = vld [vmem:[#allocation3 + $0xf0] sm:$0xff]
    %v923 = vld [vmem:[#allocation3 + $0xf8] sm:$0xff]
    %v924 = vld [vmem:[#allocation3 + $0x100] sm:$0xff]
    %v925 = vld [vmem:[#allocation3 + $0x108] sm:$0xff]
    %v926 = vld [vmem:[#allocation3 + $0x110] sm:$0xff]
    %v927 = vld [vmem:[#allocation3 + $0x118] sm:$0xff]
    %v928 = vld [vmem:[#allocation3 + $0x120] sm:$0xff]
    %v929 = vld [vmem:[#allocation3 + $0x128] sm:$0xff]
    %v930 = vld [vmem:[#allocation3 + $0x130] sm:$0xff]
    %v931 = vld [vmem:[#allocation3 + $0x138] sm:$0xff]
    %v932 = vld [vmem:[#allocation3 + $0x140] sm:$0xff]
    %v933 = vld [vmem:[#allocation3 + $0x148] sm:$0xff]
    %v934 = vld [vmem:[#allocation3 + $0x150] sm:$0xff]
    %v935 = vld [vmem:[#allocation3 + $0x158] sm:$0xff]
    %v936 = vld [vmem:[#allocation3 + $0x160] sm:$0xff]
    %v937 = vld [vmem:[#allocation3 + $0x168] sm:$0xff]
    %v938 = vld [vmem:[#allocation3 + $0x170] sm:$0xff]
    %v939 = vld [vmem:[#allocation3 + $0x178] sm:$0xff]
    %v940 = vld [vmem:[#allocation3 + $0x180] sm:$0xff]
    %v941 = vld [vmem:[#allocation3 + $0x188] sm:$0xff]
    %v942 = vld [vmem:[#allocation3 + $0x190] sm:$0xff]
    %v943 = vld [vmem:[#allocation3 + $0x198] sm:$0xff]
    %v944 = vld [vmem:[#allocation3 + $0x1a0] sm:$0xff]
    %v945 = vld [vmem:[#allocation3 + $0x1a8] sm:$0xff]
    %v946 = vld [vmem:[#allocation3 + $0x1b0] sm:$0xff]
    %v947 = vld [vmem:[#allocation3 + $0x1b8] sm:$0xff]
    %v948 = vld [vmem:[#allocation3 + $0x1c0] sm:$0xff]
    %v949 = vld [vmem:[#allocation3 + $0x1c8] sm:$0xff]
    %v950 = vld [vmem:[#allocation3 + $0x1d0] sm:$0xff]
    %v951 = vld [vmem:[#allocation3 + $0x1d8] sm:$0xff]
    %v952 = vld [vmem:[#allocation3 + $0x1e0] sm:$0xff]
    %v953 = vld [vmem:[#allocation3 + $0x1e8] sm:$0xff]
    %v954 = vld [vmem:[#allocation3 + $0x1f0] sm:$0xff]
    %v955 = vld [vmem:[#allocation3 + $0x1f8] sm:$0xff]
    %v956 = vld [vmem:[#allocation3 + $0x200] sm:$0xff]
    %v957 = vld [vmem:[#allocation3 + $0x208] sm:$0xff]
    %v958 = vld [vmem:[#allocation3 + $0x210] sm:$0xff]
    %v959 = vld [vmem:[#allocation3 + $0x218] sm:$0xff]
    %v960 = vld [vmem:[#allocation3 + $0x220] sm:$0xff]
    %v961 = vld [vmem:[#allocation3 + $0x228] sm:$0xff]
    %v962 = vld [vmem:[#allocation3 + $0x230] sm:$0xff]
    %v963 = vld [vmem:[#allocation3 + $0x238] sm:$0xff]
    %v964 = vld [vmem:[#allocation3 + $0x240] sm:$0xff]
    %v965 = vld [vmem:[#allocation3 + $0x248] sm:$0xff]
    %v966 = vld [vmem:[#allocation3 + $0x250] sm:$0xff]
    %v967 = vld [vmem:[#allocation3 + $0x258] sm:$0xff]
    %v968 = vld [vmem:[#allocation3 + $0x260] sm:$0xff]
    %v969 = vld [vmem:[#allocation3 + $0x268] sm:$0xff]
    %v970 = vld [vmem:[#allocation3 + $0x270] sm:$0xff]
    %v971 = vld [vmem:[#allocation3 + $0x278] sm:$0xff]
    %v972 = vld [vmem:[#allocation3 + $0x280] sm:$0xff]
    %v973 = vld [vmem:[#allocation3 + $0x288] sm:$0xff]
    %v974 = vld [vmem:[#allocation3 + $0x290] sm:$0xff]
    %v975 = vld [vmem:[#allocation3 + $0x298] sm:$0xff]
    %v976 = vld [vmem:[#allocation3 + $0x2a0] sm:$0xff]
    %v977 = vld [vmem:[#allocation3 + $0x2a8] sm:$0xff]
    %v978 = vld [vmem:[#allocation3 + $0x2b0] sm:$0xff]
    %v979 = vld [vmem:[#allocation3 + $0x2b8] sm:$0xff]
    %v980 = vld [vmem:[#allocation3 + $0x2c0] sm:$0xff]
    %v981 = vld [vmem:[#allocation3 + $0x2c8] sm:$0xff]
    %v982 = vld [vmem:[#allocation3 + $0x2d0] sm:$0xff]
    %v983 = vld [vmem:[#allocation3 + $0x2d8] sm:$0xff]
    %v984 = vld [vmem:[#allocation3 + $0x2e0] sm:$0xff]
    %v985 = vld [vmem:[#allocation3 + $0x2e8] sm:$0xff]
    %v986 = vld [vmem:[#allocation3 + $0x2f0] sm:$0xff]
    %v987 = vld [vmem:[#allocation3 + $0x2f8] sm:$0xff]
    %v988 = vld [vmem:[#allocation3 + $0x300] sm:$0xff]
    %v989 = vld [vmem:[#allocation3 + $0x308] sm:$0xff]
    %v990 = vld [vmem:[#allocation3 + $0x310] sm:$0xff]
    %v991 = vld [vmem:[#allocation3 + $0x318] sm:$0xff]
    %v992 = vld [vmem:[#allocation3 + $0x320] sm:$0xff]
    %v993 = vld [vmem:[#allocation3 + $0x328] sm:$0xff]
    %v994 = vld [vmem:[#allocation3 + $0x330] sm:$0xff]
    %v995 = vld [vmem:[#allocation3 + $0x338] sm:$0xff]
    %v996 = vld [vmem:[#allocation3 + $0x340] sm:$0xff]
    %v997 = vld [vmem:[#allocation3 + $0x348] sm:$0xff]
    %v998 = vld [vmem:[#allocation3 + $0x350] sm:$0xff]
    %v999 = vld [vmem:[#allocation3 + $0x358] sm:$0xff]
    %v1000 = vld [vmem:[#allocation3 + $0x360] sm:$0xff]
    %v1001 = vld [vmem:[#allocation3 + $0x368] sm:$0xff]
    %v1002 = vld [vmem:[#allocation3 + $0x370] sm:$0xff]
    %v1003 = vld [vmem:[#allocation3 + $0x378] sm:$0xff]
    %v1004 = vld [vmem:[#allocation3 + $0x380] sm:$0xff]
    %v1005 = vld [vmem:[#allocation3 + $0x388] sm:$0xff]
    %v1006 = vld [vmem:[#allocation3 + $0x390] sm:$0xff]
    %v1007 = vld [vmem:[#allocation3 + $0x398] sm:$0xff]
    %v1008 = vld [vmem:[#allocation3 + $0x3a0] sm:$0xff]
    %v1009 = vld [vmem:[#allocation3 + $0x3a8] sm:$0xff]
    %v1010 = vld [vmem:[#allocation3 + $0x3b0] sm:$0xff]
    %v1011 = vld [vmem:[#allocation3 + $0x3b8] sm:$0xff]
    %v1012 = vld [vmem:[#allocation3 + $0x3c0] sm:$0xff]
    %v1013 = vld [vmem:[#allocation3 + $0x3c8] sm:$0xff]
    %v1014 = vld [vmem:[#allocation3 + $0x3d0] sm:$0xff]
    %v1015 = vld [vmem:[#allocation3 + $0x3d8] sm:$0xff]
    %v1016 = vld [vmem:[#allocation3 + $0x3e0] sm:$0xff]
    %v1017 = vld [vmem:[#allocation3 + $0x3e8] sm:$0xff]
    %v1018 = vld [vmem:[#allocation3 + $0x3f0] sm:$0xff]
    %v1019 = vld [vmem:[#allocation3 + $0x3f8] sm:$0xff]
    %v1020 = vld [vmem:[#allocation3 + $0x400] sm:$0xff]
    %v1021 = vld [vmem:[#allocation3 + $0x408] sm:$0xff]
    %v1022 = vld [vmem:[#allocation3 + $0x410] sm:$0xff]
    %v1023 = vld [vmem:[#allocation3 + $0x418] sm:$0xff]
    %v1024 = vld [vmem:[#allocation3 + $0x420] sm:$0xff]
    %v1025 = vld [vmem:[#allocation3 + $0x428] sm:$0xff]
    %v1026 = vld [vmem:[#allocation3 + $0x430] sm:$0xff]
    %v1027 = vld [vmem:[#allocation3 + $0x438] sm:$0xff]
    %v1028 = vld [vmem:[#allocation3 + $0x440] sm:$0xff]
    %v1029 = vld [vmem:[#allocation3 + $0x448] sm:$0xff]
    %v1030 = vld [vmem:[#allocation3 + $0x450] sm:$0xff]
    %v1031 = vld [vmem:[#allocation3 + $0x458] sm:$0xff]
    %v1032 = vld [vmem:[#allocation3 + $0x460] sm:$0xff]
    %v1033 = vld [vmem:[#allocation3 + $0x468] sm:$0xff]
    %v1034 = vld [vmem:[#allocation3 + $0x470] sm:$0xff]
    %v1035 = vld [vmem:[#allocation3 + $0x478] sm:$0xff]
    %v1036 = vld [vmem:[#allocation3 + $0x480] sm:$0xff]
    %v1037 = vld [vmem:[#allocation3 + $0x488] sm:$0xff]
    %v1038 = vld [vmem:[#allocation3 + $0x490] sm:$0xff]
    %v1039 = vld [vmem:[#allocation3 + $0x498] sm:$0xff]
    %v1040 = vld [vmem:[#allocation3 + $0x4a0] sm:$0xff]
    %v1041 = vld [vmem:[#allocation3 + $0x4a8] sm:$0xff]
    %v1042 = vld [vmem:[#allocation3 + $0x4b0] sm:$0xff]
    %v1043 = vld [vmem:[#allocation3 + $0x4b8] sm:$0xff]
    %v1044 = vld [vmem:[#allocation3 + $0x4c0] sm:$0xff]
    %v1045 = vld [vmem:[#allocation3 + $0x4c8] sm:$0xff]
    %v1046 = vld [vmem:[#allocation3 + $0x4d0] sm:$0xff]
    %v1047 = vld [vmem:[#allocation3 + $0x4d8] sm:$0xff]
    %v1048 = vld [vmem:[#allocation3 + $0x4e0] sm:$0xff]
    %v1049 = vld [vmem:[#allocation3 + $0x4e8] sm:$0xff]
    %v1050 = vld [vmem:[#allocation3 + $0x4f0] sm:$0xff]
    %v1051 = vld [vmem:[#allocation3 + $0x4f8] sm:$0xff]
    %v1052 = vld [vmem:[#allocation3 + $0x500] sm:$0xff]
    %v1053 = vld [vmem:[#allocation3 + $0x508] sm:$0xff]
    %v1054 = vld [vmem:[#allocation3 + $0x510] sm:$0xff]
    %v1055 = vld [vmem:[#allocation3 + $0x518] sm:$0xff]
    %v1056 = vld [vmem:[#allocation3 + $0x520] sm:$0xff]
    %v1057 = vld [vmem:[#allocation3 + $0x528] sm:$0xff]
    %v1058 = vld [vmem:[#allocation3 + $0x530] sm:$0xff]
    %v1059 = vld [vmem:[#allocation3 + $0x538] sm:$0xff]
    %v1060 = vld [vmem:[#allocation3 + $0x540] sm:$0xff]
    %v1061 = vld [vmem:[#allocation3 + $0x548] sm:$0xff]
    %v1062 = vld [vmem:[#allocation3 + $0x550] sm:$0xff]
    %v1063 = vld [vmem:[#allocation3 + $0x558] sm:$0xff]
    %v1064 = vld [vmem:[#allocation3 + $0x560] sm:$0xff]
    %v1065 = vld [vmem:[#allocation3 + $0x568] sm:$0xff]
    %v1066 = vld [vmem:[#allocation3 + $0x570] sm:$0xff]
    %v1067 = vld [vmem:[#allocation3 + $0x578] sm:$0xff]
    %v1068 = vld [vmem:[#allocation3 + $0x580] sm:$0xff]
    %v1069 = vld [vmem:[#allocation3 + $0x588] sm:$0xff]
    %v1070 = vld [vmem:[#allocation3 + $0x590] sm:$0xff]
    %v1071 = vld [vmem:[#allocation3 + $0x598] sm:$0xff]
    %v1072 = vld [vmem:[#allocation3 + $0x5a0] sm:$0xff]
    %v1073 = vld [vmem:[#allocation3 + $0x5a8] sm:$0xff]
    %v1074 = vld [vmem:[#allocation3 + $0x5b0] sm:$0xff]
    %v1075 = vld [vmem:[#allocation3 + $0x5b8] sm:$0xff]
    %v1076 = vld [vmem:[#allocation3 + $0x5c0] sm:$0xff]
    %v1077 = vld [vmem:[#allocation3 + $0x5c8] sm:$0xff]
    %v1078 = vld [vmem:[#allocation3 + $0x5d0] sm:$0xff]
    %v1079 = vld [vmem:[#allocation3 + $0x5d8] sm:$0xff]
    %v1080 = vld [vmem:[#allocation3 + $0x5e0] sm:$0xff]
    %v1081 = vld [vmem:[#allocation3 + $0x5e8] sm:$0xff]
    %v1082 = vld [vmem:[#allocation3 + $0x5f0] sm:$0xff]
    %v1083 = vld [vmem:[#allocation3 + $0x5f8] sm:$0xff]
    %1084 = vmatprep.subr.mxu0 %v893
    %1085 = vmatpush1.msra.mxu0 %v892
    %1086 = vmatprep.subr.mxu0 %v895
    %1087 = vmatpush1.msra.mxu0 %v894
    %1088 = vmatprep.subr.mxu0 %v897
    %1089 = vmatpush1.msra.mxu0 %v896
    %1090 = vmatprep.subr.mxu0 %v899
    %1091 = vmatpush1.msra.mxu0 %v898
    %1092 = vmatprep.subr.mxu0 %v901
    %1093 = vmatpush1.msra.mxu0 %v900
    %1094 = vmatprep.subr.mxu0 %v903
    %1095 = vmatpush1.msra.mxu0 %v902
    %1096 = vmatprep.subr.mxu0 %v905
    %1097 = vmatpush1.msra.mxu0 %v904
    %1098 = vmatprep.subr.mxu0 %v907
    %1099 = vmatpush1.msra.mxu0 %v906
    %1100 = vmatprep.subr.mxu0 %v909
    %1101 = vmatpush1.msra.mxu0 %v908
    %1102 = vmatprep.subr.mxu0 %v911
    %1103 = vmatpush1.msra.mxu0 %v910
    %1104 = vmatprep.subr.mxu0 %v913
    %1105 = vmatpush1.msra.mxu0 %v912
    %1106 = vmatprep.subr.mxu0 %v915
    %1107 = vmatpush1.msra.mxu0 %v914
    %1108 = vmatprep.subr.mxu0 %v917
    %1109 = vmatpush1.msra.mxu0 %v916
    %1110 = vmatprep.subr.mxu0 %v919
    %1111 = vmatpush1.msra.mxu0 %v918
    %1112 = vmatprep.subr.mxu0 %v921
    %1113 = vmatpush1.msra.mxu0 %v920
    %1114 = vmatprep.subr.mxu0 %v923
    %1115 = vmatpush1.msra.mxu0 %v922
    %1116 = vmatprep.subr.mxu0 %v925
    %1117 = vmatpush1.msra.mxu0 %v924
    %1118 = vmatprep.subr.mxu0 %v927
    %1119 = vmatpush1.msra.mxu0 %v926
    %1120 = vmatprep.subr.mxu0 %v929
    %1121 = vmatpush1.msra.mxu0 %v928
    %1122 = vmatprep.subr.mxu0 %v931
    %1123 = vmatpush1.msra.mxu0 %v930
    %1124 = vmatprep.subr.mxu0 %v933
    %1125 = vmatpush1.msra.mxu0 %v932
    %1126 = vmatprep.subr.mxu0 %v935
    %1127 = vmatpush1.msra.mxu0 %v934
    %1128 = vmatprep.subr.mxu0 %v937
    %1129 = vmatpush1.msra.mxu0 %v936
    %1130 = vmatprep.subr.mxu0 %v939
    %1131 = vmatpush1.msra.mxu0 %v938
    %1132 = vmatprep.subr.mxu0 %v941
    %1133 = vmatpush1.msra.mxu0 %v940
    %1134 = vmatprep.subr.mxu0 %v943
    %1135 = vmatpush1.msra.mxu0 %v942
    %1136 = vmatprep.subr.mxu0 %v945
    %1137 = vmatpush1.msra.mxu0 %v944
    %1138 = vmatprep.subr.mxu0 %v947
    %1139 = vmatpush1.msra.mxu0 %v946
    %1140 = vmatprep.subr.mxu0 %v949
    %1141 = vmatpush1.msra.mxu0 %v948
    %1142 = vmatprep.subr.mxu0 %v951
    %1143 = vmatpush1.msra.mxu0 %v950
    %1144 = vmatprep.subr.mxu0 %v953
    %1145 = vmatpush1.msra.mxu0 %v952
    %1146 = vmatprep.subr.mxu0 %v955
    %1147 = vmatpush1.msra.mxu0 %v954
    %1148 = vmatprep.mubr.f32.mxu0 %v877
    %1149 = vmatmul.mubr.f32.gmra.mrb[0].mxu0 %v876
    %v1150 = vpop.f32.mrb[0].mxu0
    %v1151 = vadd.f32 0.0, %v1150
    %v1152 = vpop.f32.mrb[0].mxu0
    %v1153 = vadd.f32 0.0, %v1152
    %1154 = vmatprep.mubr.f32.mxu0 %v879
    %1155 = vmatmul.mubr.f32.gmra.mrb[0].mxu0 %v878
    %v1156 = vpop.f32.mrb[0].mxu0
    %v1157 = vadd.f32 0.0, %v1156
    %v1158 = vpop.f32.mrb[0].mxu0
    %v1159 = vadd.f32 0.0, %v1158
    %1160 = vdwg.mxu0
    %1161 = vmatprep.subr.mxu0 %v957
    %1162 = vmatpush1.msra.mxu0 %v956
    %1163 = vmatprep.subr.mxu0 %v959
    %1164 = vmatpush1.msra.mxu0 %v958
    %1165 = vmatprep.subr.mxu0 %v961
    %1166 = vmatpush1.msra.mxu0 %v960
    %1167 = vmatprep.subr.mxu0 %v963
    %1168 = vmatpush1.msra.mxu0 %v962
    %1169 = vmatprep.subr.mxu0 %v965
    %1170 = vmatpush1.msra.mxu0 %v964
    %1171 = vmatprep.subr.mxu0 %v967
    %1172 = vmatpush1.msra.mxu0 %v966
    %1173 = vmatprep.subr.mxu0 %v969
    %1174 = vmatpush1.msra.mxu0 %v968
    %1175 = vmatprep.subr.mxu0 %v971
    %1176 = vmatpush1.msra.mxu0 %v970
    %1177 = vmatprep.subr.mxu0 %v973
    %1178 = vmatpush1.msra.mxu0 %v972
    %1179 = vmatprep.subr.mxu0 %v975
    %1180 = vmatpush1.msra.mxu0 %v974
    %1181 = vmatprep.subr.mxu0 %v977
    %1182 = vmatpush1.msra.mxu0 %v976
    %1183 = vmatprep.subr.mxu0 %v979
    %1184 = vmatpush1.msra.mxu0 %v978
    %1185 = vmatprep.subr.mxu0 %v981
    %1186 = vmatpush1.msra.mxu0 %v980
    %1187 = vmatprep.subr.mxu0 %v983
    %1188 = vmatpush1.msra.mxu0 %v982
    %1189 = vmatprep.subr.mxu0 %v985
    %1190 = vmatpush1.msra.mxu0 %v984
    %1191 = vmatprep.subr.mxu0 %v987
    %1192 = vmatpush1.msra.mxu0 %v986
    %1193 = vmatprep.subr.mxu0 %v989
    %1194 = vmatpush1.msra.mxu0 %v988
    %1195 = vmatprep.subr.mxu0 %v991
    %1196 = vmatpush1.msra.mxu0 %v990
    %1197 = vmatprep.subr.mxu0 %v993
    %1198 = vmatpush1.msra.mxu0 %v992
    %1199 = vmatprep.subr.mxu0 %v995
    %1200 = vmatpush1.msra.mxu0 %v994
    %1201 = vmatprep.subr.mxu0 %v997
    %1202 = vmatpush1.msra.mxu0 %v996
    %1203 = vmatprep.subr.mxu0 %v999
    %1204 = vmatpush1.msra.mxu0 %v998
    %1205 = vmatprep.subr.mxu0 %v1001
    %1206 = vmatpush1.msra.mxu0 %v1000
    %1207 = vmatprep.subr.mxu0 %v1003
    %1208 = vmatpush1.msra.mxu0 %v1002
    %1209 = vmatprep.subr.mxu0 %v1005
    %1210 = vmatpush1.msra.mxu0 %v1004
    %1211 = vmatprep.subr.mxu0 %v1007
    %1212 = vmatpush1.msra.mxu0 %v1006
    %1213 = vmatprep.subr.mxu0 %v1009
    %1214 = vmatpush1.msra.mxu0 %v1008
    %1215 = vmatprep.subr.mxu0 %v1011
    %1216 = vmatpush1.msra.mxu0 %v1010
    %1217 = vmatprep.subr.mxu0 %v1013
    %1218 = vmatpush1.msra.mxu0 %v1012
    %1219 = vmatprep.subr.mxu0 %v1015
    %1220 = vmatpush1.msra.mxu0 %v1014
    %1221 = vmatprep.subr.mxu0 %v1017
    %1222 = vmatpush1.msra.mxu0 %v1016
    %1223 = vmatprep.subr.mxu0 %v1019
    %1224 = vmatpush1.msra.mxu0 %v1018
    %1225 = vmatprep.mubr.f32.mxu0 %v865
    %1226 = vmatmul.mubr.f32.gmra.mrb[0].mxu0 %v864
    %v1227 = vpop.f32.mrb[0].mxu0
    %v1228 = vadd.f32 %v1151, %v1227
    %v1229 = vpop.f32.mrb[0].mxu0
    %v1230 = vadd.f32 %v1153, %v1229
    %1231 = vmatprep.mubr.f32.mxu0 %v867
    %1232 = vmatmul.mubr.f32.gmra.mrb[0].mxu0 %v866
    %v1233 = vpop.f32.mrb[0].mxu0
    %v1234 = vadd.f32 %v1157, %v1233
    %v1235 = vpop.f32.mrb[0].mxu0
    %v1236 = vadd.f32 %v1159, %v1235
    %1237 = vdwg.mxu0
    %1238 = vmatprep.subr.mxu0 %v1021
    %1239 = vmatpush1.msra.mxu0 %v1020
    %1240 = vmatprep.subr.mxu0 %v1023
    %1241 = vmatpush1.msra.mxu0 %v1022
    %1242 = vmatprep.subr.mxu0 %v1025
    %1243 = vmatpush1.msra.mxu0 %v1024
    %1244 = vmatprep.subr.mxu0 %v1027
    %1245 = vmatpush1.msra.mxu0 %v1026
    %1246 = vmatprep.subr.mxu0 %v1029
    %1247 = vmatpush1.msra.mxu0 %v1028
    %1248 = vmatprep.subr.mxu0 %v1031
    %1249 = vmatpush1.msra.mxu0 %v1030
    %1250 = vmatprep.subr.mxu0 %v1033
    %1251 = vmatpush1.msra.mxu0 %v1032
    %1252 = vmatprep.subr.mxu0 %v1035
    %1253 = vmatpush1.msra.mxu0 %v1034
    %1254 = vmatprep.subr.mxu0 %v1037
    %1255 = vmatpush1.msra.mxu0 %v1036
    %1256 = vmatprep.subr.mxu0 %v1039
    %1257 = vmatpush1.msra.mxu0 %v1038
    %1258 = vmatprep.subr.mxu0 %v1041
    %1259 = vmatpush1.msra.mxu0 %v1040
    %1260 = vmatprep.subr.mxu0 %v1043
    %1261 = vmatpush1.msra.mxu0 %v1042
    %1262 = vmatprep.subr.mxu0 %v1045
    %1263 = vmatpush1.msra.mxu0 %v1044
    %1264 = vmatprep.subr.mxu0 %v1047
    %1265 = vmatpush1.msra.mxu0 %v1046
    %1266 = vmatprep.subr.mxu0 %v1049
    %1267 = vmatpush1.msra.mxu0 %v1048
    %1268 = vmatprep.subr.mxu0 %v1051
    %1269 = vmatpush1.msra.mxu0 %v1050
    %1270 = vmatprep.subr.mxu0 %v1053
    %1271 = vmatpush1.msra.mxu0 %v1052
    %1272 = vmatprep.subr.mxu0 %v1055
    %1273 = vmatpush1.msra.mxu0 %v1054
    %1274 = vmatprep.subr.mxu0 %v1057
    %1275 = vmatpush1.msra.mxu0 %v1056
    %1276 = vmatprep.subr.mxu0 %v1059
    %1277 = vmatpush1.msra.mxu0 %v1058
    %1278 = vmatprep.subr.mxu0 %v1061
    %1279 = vmatpush1.msra.mxu0 %v1060
    %1280 = vmatprep.subr.mxu0 %v1063
    %1281 = vmatpush1.msra.mxu0 %v1062
    %1282 = vmatprep.subr.mxu0 %v1065
    %1283 = vmatpush1.msra.mxu0 %v1064
    %1284 = vmatprep.subr.mxu0 %v1067
    %1285 = vmatpush1.msra.mxu0 %v1066
    %1286 = vmatprep.subr.mxu0 %v1069
    %1287 = vmatpush1.msra.mxu0 %v1068
    %1288 = vmatprep.subr.mxu0 %v1071
    %1289 = vmatpush1.msra.mxu0 %v1070
    %1290 = vmatprep.subr.mxu0 %v1073
    %1291 = vmatpush1.msra.mxu0 %v1072
    %1292 = vmatprep.subr.mxu0 %v1075
    %1293 = vmatpush1.msra.mxu0 %v1074
    %1294 = vmatprep.subr.mxu0 %v1077
    %1295 = vmatpush1.msra.mxu0 %v1076
    %1296 = vmatprep.subr.mxu0 %v1079
    %1297 = vmatpush1.msra.mxu0 %v1078
    %1298 = vmatprep.subr.mxu0 %v1081
    %1299 = vmatpush1.msra.mxu0 %v1080
    %1300 = vmatprep.subr.mxu0 %v1083
    %1301 = vmatpush1.msra.mxu0 %v1082
    %1302 = vmatprep.mubr.f32.mxu0 %v889
    %1303 = vmatmul.mubr.f32.gmra.mrb[0].mxu0 %v888
    %v1304 = vpop.f32.mrb[0].mxu0
    %v1305 = vadd.f32 %v1228, %v1304
    %v1306 = vpop.f32.mrb[0].mxu0
    %v1307 = vadd.f32 %v1230, %v1306
    %1308 = vmatprep.mubr.f32.mxu0 %v891
    %1309 = vmatmul.mubr.f32.gmra.mrb[0].mxu0 %v890
    %v1310 = vpop.f32.mrb[0].mxu0
    %v1311 = vadd.f32 %v1234, %v1310
    %v1312 = vpop.f32.mrb[0].mxu0
    %v1313 = vadd.f32 %v1236, %v1312
    %1314 = vdwg.mxu0
    %v1315 = vadd.f32 %v1305, %v1311
    %v1316 = vrot.slane %v1315, 4
    %v1317 = vadd.f32 %v1315, %v1316
    %v1318 = vrot.slane %v1317, 2
    %v1319 = vadd.f32 %v1317, %v1318
    %v1320 = vrot.slane %v1319, 1
    %v1321 = vadd.f32 %v1319, %v1320
    %v1322 = vadd.f32 %v1307, %v1313
    %v1323 = vrot.slane %v1322, 4
    %v1324 = vadd.f32 %v1322, %v1323
    %v1325 = vrot.slane %v1324, 2
    %v1326 = vadd.f32 %v1324, %v1325
    %v1327 = vrot.slane %v1326, 1
    %v1328 = vadd.f32 %v1326, %v1327
    %v1331 = vcombine.low %v1321, %v1328
    %v1333 = vunpack.c.l.s4 1966171168
    %v1334 = vunpack.c.0.s8 %v1333
    %v1335 = vlaneseq
    %v1336 = vshrl.u32 %v1335, 7
    %v1337 = vsub.s32 %v1334, %v1336
    %v1338 = vrot.slane %v1331, %v1337
    %v1340 = vunpack.c.l.s4 1966171168
    %v1341 = vunpack.c.0.s8 %v1340
    %v1342 = vlaneseq
    %v1343 = vshrl.u32 %v1342, 7
    %v1344 = vsub.s32 %v1341, %v1343
    %v1345 = vrot.slane %v1338, %v1344
    %1347 = vst.msk [vmem:[#allocation2] ss:$2 sm:$0x3] %vm564, %v1345
    %v1348 = vmul.f32 %v1305, %v1305
    %v1349 = vmul.f32 %v1307, %v1307
    %v1350 = vmul.f32 %v1311, %v1311
    %v1351 = vmul.f32 %v1313, %v1313
    %v1352 = vadd.f32 %v1348, %v1350
    %v1353 = vrot.slane %v1352, 4
    %v1354 = vadd.f32 %v1352, %v1353
    %v1355 = vrot.slane %v1354, 2
    %v1356 = vadd.f32 %v1354, %v1355
    %v1357 = vrot.slane %v1356, 1
    %v1358 = vadd.f32 %v1356, %v1357
    %v1359 = vadd.f32 %v1349, %v1351
    %v1360 = vrot.slane %v1359, 4
    %v1361 = vadd.f32 %v1359, %v1360
    %v1362 = vrot.slane %v1361, 2
    %v1363 = vadd.f32 %v1361, %v1362
    %v1364 = vrot.slane %v1363, 1
    %v1365 = vadd.f32 %v1363, %v1364
    %v1368 = vcombine.low %v1358, %v1365
    %v1370 = vunpack.c.l.s4 1966171168
    %v1371 = vunpack.c.0.s8 %v1370
    %v1372 = vlaneseq
    %v1373 = vshrl.u32 %v1372, 7
    %v1374 = vsub.s32 %v1371, %v1373
    %v1375 = vrot.slane %v1368, %v1374
    %v1377 = vunpack.c.l.s4 1966171168
    %v1378 = vunpack.c.0.s8 %v1377
    %v1379 = vlaneseq
    %v1380 = vshrl.u32 %v1379, 7
    %v1381 = vsub.s32 %v1378, %v1380
    %v1382 = vrot.slane %v1375, %v1381
    %1384 = vst.msk [vmem:[%s602] ss:$2 sm:$0x3] %vm564, %v1382
    %v1385 = vld [vmem:[#allocation2] sm:$0xf]
    %v1386 = vld [vmem:[%s3] sm:$0xff]
    %v1387 = vld [vmem:[%s3 + $0x8] sm:$0xff]
    %v1388 = vld [vmem:[%s3 + $0x10] sm:$0xff]
    %v1389 = vld [vmem:[%s3 + $0x18] sm:$0xff]
    %v1390 = vld [vmem:[%s3 + $0x20] sm:$0xff]
    %v1391 = vld [vmem:[%s3 + $0x28] sm:$0xff]
    %v1392 = vld [vmem:[%s3 + $0x30] sm:$0xff]
    %v1393 = vld [vmem:[%s3 + $0x38] sm:$0xff]
    %v1394 = vld [vmem:[%s3 + $0x40] sm:$0xff]
    %v1395 = vld [vmem:[%s3 + $0x48] sm:$0xff]
    %v1396 = vld [vmem:[%s3 + $0x50] sm:$0xff]
    %v1397 = vld [vmem:[%s3 + $0x58] sm:$0xff]
    %v1398 = vld [vmem:[%s3 + $0x60] sm:$0xff]
    %v1399 = vld [vmem:[%s3 + $0x68] sm:$0xff]
    %v1400 = vld [vmem:[%s3 + $0x70] sm:$0xff]
    %v1401 = vld [vmem:[%s3 + $0x78] sm:$0xff]
    %v1402 = vld [vmem:[%s3 + $0x80] sm:$0xff]
    %v1403 = vld [vmem:[%s3 + $0x88] sm:$0xff]
    %v1404 = vld [vmem:[%s3 + $0x90] sm:$0xff]
    %v1405 = vld [vmem:[%s3 + $0x98] sm:$0xff]
    %v1406 = vld [vmem:[%s3 + $0xa0] sm:$0xff]
    %v1407 = vld [vmem:[%s3 + $0xa8] sm:$0xff]
    %v1408 = vld [vmem:[%s3 + $0xb0] sm:$0xff]
    %v1409 = vld [vmem:[%s3 + $0xb8] sm:$0xff]
    %v1410 = vld [vmem:[%s3 + $0xc0] sm:$0xff]
    %v1411 = vld [vmem:[%s3 + $0xc8] sm:$0xff]
    %v1412 = vld [vmem:[%s3 + $0xd0] sm:$0xff]
    %v1413 = vld [vmem:[%s3 + $0xd8] sm:$0xff]
    %v1414 = vld [vmem:[%s3 + $0xe0] sm:$0xff]
    %v1415 = vld [vmem:[%s3 + $0xe8] sm:$0xff]
    %v1416 = vld [vmem:[%s3 + $0xf0] sm:$0xff]
    %v1417 = vld [vmem:[%s3 + $0xf8] sm:$0xff]
    %v1420 = vunpack.c.l.s4 1983009808
    %v1421 = vunpack.c.0.s8 %v1420
    %v1422 = vlaneseq
    %v1423 = vshrl.u32 %v1422, 7
    %v1424 = vsub.s32 %v1421, %v1423
    %v1425 = vrot.slane %v1385, %v1424
    %v1426 = vcombine.high %v1425, %v1425
    %1429 = vmatprep.subr.mxu0 0.0
    %1430 = vmatpush1.msra.mxu0 %v1386
    %1431 = vmatprep.subr.mxu0 0.0
    %1432 = vmatpush1.msra.mxu0 %v1387
    %1433 = vmatprep.subr.mxu0 0.0
    %1434 = vmatpush1.msra.mxu0 %v1388
    %1435 = vmatprep.subr.mxu0 0.0
    %1436 = vmatpush1.msra.mxu0 %v1389
    %1437 = vmatprep.subr.mxu0 0.0
    %1438 = vmatpush1.msra.mxu0 %v1390
    %1439 = vmatprep.subr.mxu0 0.0
    %1440 = vmatpush1.msra.mxu0 %v1391
    %1441 = vmatprep.subr.mxu0 0.0
    %1442 = vmatpush1.msra.mxu0 %v1392
    %1443 = vmatprep.subr.mxu0 0.0
    %1444 = vmatpush1.msra.mxu0 %v1393
    %1445 = vmatprep.subr.mxu0 0.0
    %1446 = vmatpush1.msra.mxu0 %v1394
    %1447 = vmatprep.subr.mxu0 0.0
    %1448 = vmatpush1.msra.mxu0 %v1395
    %1449 = vmatprep.subr.mxu0 0.0
    %1450 = vmatpush1.msra.mxu0 %v1396
    %1451 = vmatprep.subr.mxu0 0.0
    %1452 = vmatpush1.msra.mxu0 %v1397
    %1453 = vmatprep.subr.mxu0 0.0
    %1454 = vmatpush1.msra.mxu0 %v1398
    %1455 = vmatprep.subr.mxu0 0.0
    %1456 = vmatpush1.msra.mxu0 %v1399
    %1457 = vmatprep.subr.mxu0 0.0
    %1458 = vmatpush1.msra.mxu0 %v1400
    %1459 = vmatprep.subr.mxu0 0.0
    %1460 = vmatpush1.msra.mxu0 %v1401
    %1461 = vmatprep.subr.mxu0 0.0
    %1462 = vmatpush1.msra.mxu0 %v1402
    %1463 = vmatprep.subr.mxu0 0.0
    %1464 = vmatpush1.msra.mxu0 %v1403
    %1465 = vmatprep.subr.mxu0 0.0
    %1466 = vmatpush1.msra.mxu0 %v1404
    %1467 = vmatprep.subr.mxu0 0.0
    %1468 = vmatpush1.msra.mxu0 %v1405
    %1469 = vmatprep.subr.mxu0 0.0
    %1470 = vmatpush1.msra.mxu0 %v1406
    %1471 = vmatprep.subr.mxu0 0.0
    %1472 = vmatpush1.msra.mxu0 %v1407
    %1473 = vmatprep.subr.mxu0 0.0
    %1474 = vmatpush1.msra.mxu0 %v1408
    %1475 = vmatprep.subr.mxu0 0.0
    %1476 = vmatpush1.msra.mxu0 %v1409
    %1477 = vmatprep.subr.mxu0 0.0
    %1478 = vmatpush1.msra.mxu0 %v1410
    %1479 = vmatprep.subr.mxu0 0.0
    %1480 = vmatpush1.msra.mxu0 %v1411
    %1481 = vmatprep.subr.mxu0 0.0
    %1482 = vmatpush1.msra.mxu0 %v1412
    %1483 = vmatprep.subr.mxu0 0.0
    %1484 = vmatpush1.msra.mxu0 %v1413
    %1485 = vmatprep.subr.mxu0 0.0
    %1486 = vmatpush1.msra.mxu0 %v1414
    %1487 = vmatprep.subr.mxu0 0.0
    %1488 = vmatpush1.msra.mxu0 %v1415
    %1489 = vmatprep.subr.mxu0 0.0
    %1490 = vmatpush1.msra.mxu0 %v1416
    %1491 = vmatprep.subr.mxu0 0.0
    %1492 = vmatpush1.msra.mxu0 %v1417
    %1493 = vmatprep.mubr.f32.mxu0 %v1426
    %1494 = vmatmul.mubr.f32.gmra.mrb[0].mxu0 %v1425
    %v1495 = vpop.f32.mrb[0].mxu0
    %v1496 = vadd.f32 0.0, %v1495
    %v1497 = vpop.f32.mrb[0].mxu0
    %1498 = vdwg.mxu0
    %v1499 = vmul.f32 %v1496, %v1496
    %v1501 = vrot.slane %v1499, 7
    %v1503 = vsub.f32 %v1496, %v1501
    %v1504 = vadd.f32 %v1503, 1e-05
    %v1505 = vrsqrt.pop %v1504
    %v1506 = vsel %vm727, %v1496, 1.0
    %v1507 = vlaneseq
    %v1508 = vshrl.u32 %v1507, 7
    %v1509 = vsub.s32 1, %v1508
    %v1510 = vrot.slane %v1505, %v1509
    %v1511 = vmul.f32 %v1506, %v1510
    %s1512 = scalar_lea.vmem %s4, 8
    %v1513 = vld [vmem:[%s1512] sm:$0xff]
    %v1515 = vcombine.high %v1513, %v1513
    %v1517 = vsel %vm737, %v1511, 0
    %v1519 = vsel %vm741, %v1513, 0
    %v1521 = vsel %vm741, %v1515, 0
    %1523 = vmatprep.subr.mxu0 %v1521
    %1524 = vmatpush1.msra.mxu0 %v1519
    %1525 = vmatprep.subr.mxu0 0.0
    %1526 = vmatpush1.msra.mxu0 0.0
    %1527 = vmatprep.subr.mxu0 0.0
    %1528 = vmatpush1.msra.mxu0 0.0
    %1529 = vmatprep.subr.mxu0 0.0
    %1530 = vmatpush1.msra.mxu0 0.0
    %1531 = vmatprep.subr.mxu0 0.0
    %1532 = vmatpush1.msra.mxu0 0.0
    %1533 = vmatprep.subr.mxu0 0.0
    %1534 = vmatpush1.msra.mxu0 0.0
    %1535 = vmatprep.subr.mxu0 0.0
    %1536 = vmatpush1.msra.mxu0 0.0
    %1537 = vmatprep.subr.mxu0 0.0
    %1538 = vmatpush1.msra.mxu0 0.0
    %1539 = vmatprep.subr.mxu0 0.0
    %1540 = vmatpush1.msra.mxu0 0.0
    %1541 = vmatprep.subr.mxu0 0.0
    %1542 = vmatpush1.msra.mxu0 0.0
    %1543 = vmatprep.subr.mxu0 0.0
    %1544 = vmatpush1.msra.mxu0 0.0
    %1545 = vmatprep.subr.mxu0 0.0
    %1546 = vmatpush1.msra.mxu0 0.0
    %1547 = vmatprep.subr.mxu0 0.0
    %1548 = vmatpush1.msra.mxu0 0.0
    %1549 = vmatprep.subr.mxu0 0.0
    %1550 = vmatpush1.msra.mxu0 0.0
    %1551 = vmatprep.subr.mxu0 0.0
    %1552 = vmatpush1.msra.mxu0 0.0
    %1553 = vmatprep.subr.mxu0 0.0
    %1554 = vmatpush1.msra.mxu0 0.0
    %1555 = vmatprep.subr.mxu0 0.0
    %1556 = vmatpush1.msra.mxu0 0.0
    %1557 = vmatprep.subr.mxu0 0.0
    %1558 = vmatpush1.msra.mxu0 0.0
    %1559 = vmatprep.subr.mxu0 0.0
    %1560 = vmatpush1.msra.mxu0 0.0
    %1561 = vmatprep.subr.mxu0 0.0
    %1562 = vmatpush1.msra.mxu0 0.0
    %1563 = vmatprep.subr.mxu0 0.0
    %1564 = vmatpush1.msra.mxu0 0.0
    %1565 = vmatprep.subr.mxu0 0.0
    %1566 = vmatpush1.msra.mxu0 0.0
    %1567 = vmatprep.subr.mxu0 0.0
    %1568 = vmatpush1.msra.mxu0 0.0
    %1569 = vmatprep.subr.mxu0 0.0
    %1570 = vmatpush1.msra.mxu0 0.0
    %1571 = vmatprep.subr.mxu0 0.0
    %1572 = vmatpush1.msra.mxu0 0.0
    %1573 = vmatprep.subr.mxu0 0.0
    %1574 = vmatpush1.msra.mxu0 0.0
    %1575 = vmatprep.subr.mxu0 0.0
    %1576 = vmatpush1.msra.mxu0 0.0
    %1577 = vmatprep.subr.mxu0 0.0
    %1578 = vmatpush1.msra.mxu0 0.0
    %1579 = vmatprep.subr.mxu0 0.0
    %1580 = vmatpush1.msra.mxu0 0.0
    %1581 = vmatprep.subr.mxu0 0.0
    %1582 = vmatpush1.msra.mxu0 0.0
    %1583 = vmatprep.subr.mxu0 0.0
    %1584 = vmatpush1.msra.mxu0 0.0
    %1585 = vmatprep.subr.mxu0 0.0
    %1586 = vmatpush1.msra.mxu0 0.0
    %1587 = vmatprep.mubr.f32.mxu0 0.0
    %1588 = vmatmul.mubr.f32.gmra.mrb[0].mxu0 %v1517
    %v1589 = vpop.f32.mrb[0].mxu0
    %v1590 = vadd.f32 0.0, %v1589
    %v1591 = vpop.f32.mrb[0].mxu0
    %v1592 = vadd.f32 0.0, %v1591
    %1593 = vdwg.mxu0
    %s1594 = scalar_lea.vmem %s5, 1
    %v1595 = vld [vmem:[%s1594] ss:$2 sm:$0x3]
    %v1598 = vcombine.low %v1590, %v1592
    %v1600 = vunpack.c.l.s4 1966171168
    %v1601 = vunpack.c.0.s8 %v1600
    %v1602 = vlaneseq
    %v1603 = vshrl.u32 %v1602, 7
    %v1604 = vsub.s32 %v1601, %v1603
    %v1605 = vrot.slane %v1598, %v1604
    %v1607 = vunpack.c.l.s4 1966171168
    %v1608 = vunpack.c.0.s8 %v1607
    %v1609 = vlaneseq
    %v1610 = vshrl.u32 %v1609, 7
    %v1611 = vsub.s32 %v1608, %v1610
    %v1612 = vrot.slane %v1605, %v1611
    %v1614 = vsub.f32 %v1595, %v1612
    %v1615 = vlaneseq
    %v1616 = vshrl.u32 %v1615, 7
    %v1617 = vsub.s32 1, %v1616
    %v1618 = vrot.slane %v1590, %v1617
    %v1619 = vlaneseq
    %v1620 = vshrl.u32 %v1619, 7
    %v1621 = vsub.s32 1, %v1620
    %v1622 = vrot.slane %v1592, %v1621
    %v1623 = vmul.f32 %v1305, %v1618
    %v1624 = vmul.f32 %v1307, %v1622
    %v1625 = vmul.f32 %v1311, %v1618
    %v1626 = vmul.f32 %v1313, %v1622
    %v1628 = vlaneseq
    %v1629 = vshrl.u32 %v1628, 7
    %v1630 = vsub.s32 0, %v1629
    %v1631 = vrot.slane %v1614, %v1630
    %v1632 = vlaneseq
    %v1633 = vshrl.u32 %v1632, 7
    %v1634 = vsub.s32 1, %v1633
    %v1635 = vrot.slane %v1614, %v1634
    %v1638 = vadd.f32 %v1623, %v1631
    %v1639 = vadd.f32 %v1624, %v1635
    %v1640 = vadd.f32 %v1625, %v1631
    %v1641 = vadd.f32 %v1626, %v1635
    %v1642 = vadd.f32 %v1638, %v37
    %v1643 = vadd.f32 %v1639, %v38
    %v1644 = vadd.f32 %v1640, %v39
    %v1645 = vadd.f32 %v1641, %v40
    %v1646 = vmax.f32 %v1642, 0.0
    %v1647 = vmax.f32 %v1643, 0.0
    %v1648 = vmax.f32 %v1644, 0.0
    %v1649 = vmax.f32 %v1645, 0.0
    %1650 = vst [vmem:[%s6] sm:$0xff] %v1646
    %1651 = vst [vmem:[%s6 + $0x8] sm:$0xff] %v1647
    %1652 = vst [vmem:[%s6 + $0x10] sm:$0xff] %v1648
    %1653 = vst [vmem:[%s6 + $0x18] sm:$0xff] %v1649
    // Predicated region
    $region30: #{basic_block_apply.1} parent=1 // pred_check
      _
    $region31: #{basic_block_apply.1} parent=1 // pred_check_branch
      %1655 = sbr.rel (0) target = $region33
    $region32: #{basic_block_apply.1} parent=1 // pred_region
      _
    $region33: #{basic_block_apply.1} parent=1 // pred_fallthru
      _
    // Predicated region
    $region34: #{basic_block_apply.1} parent=1 // pred_check
      _
    $region35: #{basic_block_apply.1} parent=1 // pred_check_branch
      %1657 = sbr.rel (0) target = $region37
    $region36: #{basic_block_apply.1} parent=1 // pred_region
      _
    $region37: #{basic_block_apply.1} parent=1 // pred_fallthru
      _
    %1658 = vsyncpa [#allocation4], 1

</llo_original>
